<compile_context>
chip_gen: v7x
topology: tpu7x:2x2x1
jax: 0.10.0
libtpu: 0.0.40
codegen_flags: <defaults>
</compile_context>

<pallas_src>
import math

import jax
import jax.numpy as jnp
from jax.experimental import pallas as pl
from jax.experimental.pallas import tpu as pltpu


def predictor_kernel(compound_ref, protein_ref,
                     w_enc_ref, b_enc_ref,
                     w_q_ref, w_k_ref, w_v_ref,
                     w_out_ref, b_out_ref,
                     out_ref):
    Bt, N, A = compound_ref.shape
    _, P, Dp = protein_ref.shape
    H = w_q_ref.shape[1]

    # Fold the per-step batch into the matmul M dimension (N=P=8 keeps the
    # collapse sublane-tile aligned, so the reshape is layout-free).
    comp = compound_ref[...].reshape(Bt * N, A)        # (Bt*N, A)
    prot = protein_ref[...].reshape(Bt * P, Dp)        # (Bt*P, Dp)

    # ---- encoder: enc_src = tanh(protein @ W_enc + b_enc) ----
    enc = jnp.tanh(
        jnp.dot(prot, w_enc_ref[...], preferred_element_type=jnp.float32)
        + b_enc_ref[...])                              # (Bt*P, H)

    # ---- decoder projections (single big matmuls over the folded batch) ----
    q = jnp.dot(comp, w_q_ref[...], preferred_element_type=jnp.float32)   # (Bt*N, H)
    k = jnp.dot(enc, w_k_ref[...], preferred_element_type=jnp.float32)    # (Bt*P, H)
    v = jnp.dot(enc, w_v_ref[...], preferred_element_type=jnp.float32)    # (Bt*P, H)

    q3 = q.reshape(Bt, N, H)
    k3 = k.reshape(Bt, P, H)
    v3 = v.reshape(Bt, P, H)

    # ---- per-sample cross attention; contraction over the last dim (no k.T) ----
    scale = 1.0 / math.sqrt(H)
    scores = jnp.einsum("bnh,bph->bnp", q3, k3,
                        preferred_element_type=jnp.float32) * scale       # (Bt, N, P)

    # numerically-stable softmax over the protein axis
    m = jnp.max(scores, axis=-1, keepdims=True)
    e = jnp.exp(scores - m)
    denom = jnp.sum(e, axis=-1, keepdims=True)
    attn = e * pl.reciprocal(denom, approx=True)                          # (Bt, N, P)

    # mean over atoms commutes with the value matmul:
    #   mean_n(attn @ v) == mean_n(attn) @ v   -> skip the full (N,P)x(P,H) matmul
    pooled_attn = jnp.mean(attn, axis=1, keepdims=True)                   # (Bt, 1, P)
    pooled = jnp.einsum("bqp,bph->bqh", pooled_attn, v3,
                        preferred_element_type=jnp.float32)               # (Bt, 1, H)
    pooled = pooled.reshape(Bt, H)

    # ---- head: linear to 2 interaction classes ----
    logits = jnp.dot(pooled, w_out_ref[...],
                     preferred_element_type=jnp.float32) + b_out_ref[...]  # (Bt, 2)
    out_ref[0] = logits


def predictor_forward(compound, protein, params, *, block_b=None):
    B, N, A = compound.shape
    _, P, Dp = protein.shape
    H = params["w_q"].shape[1]

    if block_b is None:
        # Fold as many samples as possible per grid step (per-step overhead is
        # ~600 cycles) while keeping >= 2 steps so both TensorCores get work on
        # v7x; cap the block so per-step VMEM stays tiny at huge batch sizes.
        block_b = min(max(1, pl.cdiv(B, 2)), 64)
    num_steps = pl.cdiv(B, block_b)
    B_pad = num_steps * block_b
    if B_pad != B:
        pad = B_pad - B
        compound = jnp.pad(compound, ((0, pad), (0, 0), (0, 0)))
        protein = jnp.pad(protein, ((0, pad), (0, 0), (0, 0)))

    out = pl.pallas_call(
        predictor_kernel,
        out_shape=jax.ShapeDtypeStruct((num_steps, block_b, 2), jnp.float32),
        grid_spec=pltpu.PrefetchScalarGridSpec(
            num_scalar_prefetch=0,
            grid=(num_steps,),
            in_specs=[
                pl.BlockSpec((block_b, N, A), lambda s: (s, 0, 0)),   # compound
                pl.BlockSpec((block_b, P, Dp), lambda s: (s, 0, 0)),  # protein
                pl.BlockSpec((Dp, H), lambda s: (0, 0)),              # w_enc (resident)
                pl.BlockSpec((1, H), lambda s: (0, 0)),               # b_enc
                pl.BlockSpec((A, H), lambda s: (0, 0)),               # w_q
                pl.BlockSpec((H, H), lambda s: (0, 0)),               # w_k
                pl.BlockSpec((H, H), lambda s: (0, 0)),               # w_v
                pl.BlockSpec((H, 2), lambda s: (0, 0)),               # w_out
                pl.BlockSpec((1, 2), lambda s: (0, 0)),               # b_out
            ],
            out_specs=pl.BlockSpec((1, block_b, 2), lambda s: (s, 0, 0)),
        ),
        compiler_params=pltpu.CompilerParams(
            dimension_semantics=("parallel",)),
    )(compound, protein,
      params["w_enc"], params["b_enc"],
      params["w_q"], params["w_k"], params["w_v"],
      params["w_out"], params["b_out"])
    return out.reshape(B_pad, 2)[:B]                                  # (B, 2)


def predictor_forward_ref(compound, protein, params):
    """Pure-JAX reference for correctness checking."""
    enc = jnp.tanh(jnp.einsum("bpd,dh->bph", protein, params["w_enc"]) + params["b_enc"])
    q = jnp.einsum("bna,ah->bnh", compound, params["w_q"])
    k = jnp.einsum("bph,hk->bpk", enc, params["w_k"])
    v = jnp.einsum("bph,hk->bpk", enc, params["w_v"])
    scores = jnp.einsum("bnh,bph->bnp", q, k) / math.sqrt(q.shape[-1])
    attn = jax.nn.softmax(scores, axis=-1)
    ctx = jnp.einsum("bnp,bph->bnh", attn, v)
    pooled = jnp.mean(ctx, axis=1)
    return pooled @ params["w_out"] + params["b_out"]


def init_params(key, atom_dim=32, prot_dim=32, hid_dim=32):
    ks = jax.random.split(key, 8)
    stdv = 1.0 / math.sqrt(atom_dim)
    u = lambda k, shape, s: jax.random.uniform(k, shape, jnp.float32, -s, s)
    params = {
        # Predictor.weight — initialized as in init_weight(), unused in forward()
        "predictor_weight": u(ks[0], (atom_dim, atom_dim), stdv),
        "w_enc": u(ks[1], (prot_dim, hid_dim), 1.0 / math.sqrt(prot_dim)),
        "b_enc": jnp.zeros((1, hid_dim), jnp.float32),
        "w_q": u(ks[2], (atom_dim, hid_dim), 1.0 / math.sqrt(atom_dim)),
        "w_k": u(ks[3], (hid_dim, hid_dim), 1.0 / math.sqrt(hid_dim)),
        "w_v": u(ks[4], (hid_dim, hid_dim), 1.0 / math.sqrt(hid_dim)),
        "w_out": u(ks[5], (hid_dim, 2), 1.0 / math.sqrt(hid_dim)),
        "b_out": jnp.zeros((1, 2), jnp.float32),
    }
    return params


if __name__ == "__main__":
    key = jax.random.PRNGKey(0)
    k_param, k_comp, k_prot = jax.random.split(key, 3)

    # batch deliberately not divisible by the per-step block to exercise the
    # batch-folding + padding path (block_b = ceil(5/2) = 3, 2 grid steps)
    B, N, A = 5, 8, 32      # batch, atoms per compound, atom feature dim (atom_dim=32)
    P, Dp, H = 8, 32, 32    # protein length, protein feature dim, hidden dim

    params = init_params(k_param, atom_dim=A, prot_dim=Dp, hid_dim=H)
    compound = jax.random.normal(k_comp, (B, N, A), jnp.float32)
    protein = jax.random.normal(k_prot, (B, P, Dp), jnp.float32)

    out = jax.block_until_ready(predictor_forward(compound, protein, params))
    ref = predictor_forward_ref(compound, protein, params)

    assert out.shape == (B, 2)
    assert jnp.allclose(out, ref, rtol=1e-4, atol=1e-4), (out, ref)

    print("KERNEL_OK")
</pallas_src>

<mosaic_0001>
module attributes {stable_mosaic.version = 11 : i64} {
  func.func @predictor_kernel(%arg0: i32, %arg1: memref<3x8x32xf32, #tpu.memory_space<vmem>>, %arg2: memref<3x8x32xf32, #tpu.memory_space<vmem>>, %arg3: memref<32x32xf32, #tpu.memory_space<vmem>>, %arg4: memref<1x32xf32, #tpu.memory_space<vmem>>, %arg5: memref<32x32xf32, #tpu.memory_space<vmem>>, %arg6: memref<32x32xf32, #tpu.memory_space<vmem>>, %arg7: memref<32x32xf32, #tpu.memory_space<vmem>>, %arg8: memref<32x2xf32, #tpu.memory_space<vmem>>, %arg9: memref<1x2xf32, #tpu.memory_space<vmem>>, %arg10: memref<1x3x2xf32, #tpu.memory_space<vmem>>) attributes {dimension_semantics = [#tpu.dimension_semantics<parallel>], iteration_bounds = array<i64: 2>, scalar_prefetch = 0 : i64, scratch_operands = 0 : i64, tpu.core_type = #tpu.core_type<tc>, window_params = [{transform_indices = @transform_0, window_bounds = array<i64: 3, 8, 32>}, {transform_indices = @transform_1, window_bounds = array<i64: 3, 8, 32>}, {pipeline_mode = #tpu.pipeline_mode<synchronous>, transform_indices = @transform_2, window_bounds = array<i64: 32, 32>}, {pipeline_mode = #tpu.pipeline_mode<synchronous>, transform_indices = @transform_3, window_bounds = array<i64: 1, 32>}, {pipeline_mode = #tpu.pipeline_mode<synchronous>, transform_indices = @transform_4, window_bounds = array<i64: 32, 32>}, {pipeline_mode = #tpu.pipeline_mode<synchronous>, transform_indices = @transform_5, window_bounds = array<i64: 32, 32>}, {pipeline_mode = #tpu.pipeline_mode<synchronous>, transform_indices = @transform_6, window_bounds = array<i64: 32, 32>}, {pipeline_mode = #tpu.pipeline_mode<synchronous>, transform_indices = @transform_7, window_bounds = array<i64: 32, 2>}, {pipeline_mode = #tpu.pipeline_mode<synchronous>, transform_indices = @transform_8, window_bounds = array<i64: 1, 2>}, {transform_indices = @transform_9, window_bounds = array<i64: 1, 3, 2>}]} {
    %c0 = arith.constant 0 : index
    %c0_0 = arith.constant 0 : index
    %c0_1 = arith.constant 0 : index
    %0 = vector.load %arg1[%c0, %c0_0, %c0_1] : memref<3x8x32xf32, #tpu.memory_space<vmem>>, vector<3x8x32xf32>
    %1 = vector.shape_cast %0 : vector<3x8x32xf32> to vector<24x32xf32>
    %c0_2 = arith.constant 0 : index
    %c0_3 = arith.constant 0 : index
    %c0_4 = arith.constant 0 : index
    %2 = vector.load %arg2[%c0_2, %c0_3, %c0_4] : memref<3x8x32xf32, #tpu.memory_space<vmem>>, vector<3x8x32xf32>
    %3 = vector.shape_cast %2 : vector<3x8x32xf32> to vector<24x32xf32>
    %c0_5 = arith.constant 0 : index
    %c0_6 = arith.constant 0 : index
    %4 = vector.load %arg3[%c0_5, %c0_6] : memref<32x32xf32, #tpu.memory_space<vmem>>, vector<32x32xf32>
    %cst = arith.constant dense<0.000000e+00> : vector<24x32xf32>
    %5 = tpu.matmul %3, %4, %cst {dimension_numbers = #tpu.dot_dimension_numbers<[1], [0], [0], [1], [0, 0, 1, 1], [], []>} : vector<24x32xf32>, vector<32x32xf32>, vector<24x32xf32> -> vector<24x32xf32>
    %c0_7 = arith.constant 0 : index
    %c0_8 = arith.constant 0 : index
    %6 = vector.load %arg4[%c0_7, %c0_8] : memref<1x32xf32, #tpu.memory_space<vmem>>, vector<1x32xf32>
    %7 = vector.broadcast %6 : vector<1x32xf32> to vector<24x32xf32>
    %8 = arith.addf %5, %7 : vector<24x32xf32>
    %9 = math.tanh %8 : vector<24x32xf32>
    %c0_9 = arith.constant 0 : index
    %c0_10 = arith.constant 0 : index
    %10 = vector.load %arg5[%c0_9, %c0_10] : memref<32x32xf32, #tpu.memory_space<vmem>>, vector<32x32xf32>
    %cst_11 = arith.constant dense<0.000000e+00> : vector<24x32xf32>
    %11 = tpu.matmul %1, %10, %cst_11 {dimension_numbers = #tpu.dot_dimension_numbers<[1], [0], [0], [1], [0, 0, 1, 1], [], []>} : vector<24x32xf32>, vector<32x32xf32>, vector<24x32xf32> -> vector<24x32xf32>
    %c0_12 = arith.constant 0 : index
    %c0_13 = arith.constant 0 : index
    %12 = vector.load %arg6[%c0_12, %c0_13] : memref<32x32xf32, #tpu.memory_space<vmem>>, vector<32x32xf32>
    %cst_14 = arith.constant dense<0.000000e+00> : vector<24x32xf32>
    %13 = tpu.matmul %9, %12, %cst_14 {dimension_numbers = #tpu.dot_dimension_numbers<[1], [0], [0], [1], [0, 0, 1, 1], [], []>} : vector<24x32xf32>, vector<32x32xf32>, vector<24x32xf32> -> vector<24x32xf32>
    %c0_15 = arith.constant 0 : index
    %c0_16 = arith.constant 0 : index
    %14 = vector.load %arg7[%c0_15, %c0_16] : memref<32x32xf32, #tpu.memory_space<vmem>>, vector<32x32xf32>
    %cst_17 = arith.constant dense<0.000000e+00> : vector<24x32xf32>
    %15 = tpu.matmul %9, %14, %cst_17 {dimension_numbers = #tpu.dot_dimension_numbers<[1], [0], [0], [1], [0, 0, 1, 1], [], []>} : vector<24x32xf32>, vector<32x32xf32>, vector<24x32xf32> -> vector<24x32xf32>
    %16 = vector.shape_cast %11 : vector<24x32xf32> to vector<3x8x32xf32>
    %17 = vector.shape_cast %13 : vector<24x32xf32> to vector<3x8x32xf32>
    %18 = vector.shape_cast %15 : vector<24x32xf32> to vector<3x8x32xf32>
    "tpu.trace_start"() <{level = 10 : i32, message = "bnh,bph->bnp"}> : () -> ()
    %cst_18 = arith.constant dense<0.000000e+00> : vector<3x8x8xf32>
    %19 = tpu.matmul %16, %17, %cst_18 {dimension_numbers = #tpu.dot_dimension_numbers<[2], [2], [1], [1], [0, 0, 0, 1, 1, 1], [0], [0]>} : vector<3x8x32xf32>, vector<3x8x32xf32>, vector<3x8x8xf32> -> vector<3x8x8xf32>
    "tpu.trace_stop"() : () -> ()
    %cst_19 = arith.constant 0.176776692 : f32
    %20 = vector.broadcast %cst_19 : f32 to vector<3x8x8xf32>
    %21 = arith.mulf %19, %20 : vector<3x8x8xf32>
    %cst_20 = arith.constant dense<0xFF800000> : vector<3x8xf32>
    %22 = vector.multi_reduction <maximumf>, %21, %cst_20 [2] : vector<3x8x8xf32> to vector<3x8xf32>
    %23 = vector.shape_cast %22 : vector<3x8xf32> to vector<3x8x1xf32>
    %24 = vector.broadcast %23 : vector<3x8x1xf32> to vector<3x8x8xf32>
    %25 = arith.subf %21, %24 : vector<3x8x8xf32>
    %26 = math.exp %25 : vector<3x8x8xf32>
    %cst_21 = arith.constant dense<0.000000e+00> : vector<3x8xf32>
    %27 = vector.multi_reduction <add>, %26, %cst_21 [2] : vector<3x8x8xf32> to vector<3x8xf32>
    %28 = vector.shape_cast %27 : vector<3x8xf32> to vector<3x8x1xf32>
    %29 = tpu.reciprocal %28 {approx = true} : vector<3x8x1xf32> -> vector<3x8x1xf32>
    %30 = vector.broadcast %29 : vector<3x8x1xf32> to vector<3x8x8xf32>
    %31 = arith.mulf %26, %30 : vector<3x8x8xf32>
    %cst_22 = arith.constant dense<0.000000e+00> : vector<3x8xf32>
    %32 = vector.multi_reduction <add>, %31, %cst_22 [1] : vector<3x8x8xf32> to vector<3x8xf32>
    %33 = vector.shape_cast %32 : vector<3x8xf32> to vector<3x1x8xf32>
    %cst_23 = arith.constant 8.000000e+00 : f32
    %34 = vector.broadcast %cst_23 : f32 to vector<3x1x8xf32>
    %35 = arith.divf %33, %34 : vector<3x1x8xf32>
    "tpu.trace_start"() <{level = 10 : i32, message = "bqp,bph->bqh"}> : () -> ()
    %cst_24 = arith.constant dense<0.000000e+00> : vector<3x1x32xf32>
    %36 = tpu.matmul %35, %18, %cst_24 {dimension_numbers = #tpu.dot_dimension_numbers<[2], [1], [1], [2], [0, 0, 0, 1, 1, 2], [0], [0]>} : vector<3x1x8xf32>, vector<3x8x32xf32>, vector<3x1x32xf32> -> vector<3x1x32xf32>
    "tpu.trace_stop"() : () -> ()
    %37 = vector.shape_cast %36 : vector<3x1x32xf32> to vector<3x32xf32>
    %c0_25 = arith.constant 0 : index
    %c0_26 = arith.constant 0 : index
    %38 = vector.load %arg8[%c0_25, %c0_26] : memref<32x2xf32, #tpu.memory_space<vmem>>, vector<32x2xf32>
    %cst_27 = arith.constant dense<0.000000e+00> : vector<3x2xf32>
    %39 = tpu.matmul %37, %38, %cst_27 {dimension_numbers = #tpu.dot_dimension_numbers<[1], [0], [0], [1], [0, 0, 1, 1], [], []>} : vector<3x32xf32>, vector<32x2xf32>, vector<3x2xf32> -> vector<3x2xf32>
    %c0_28 = arith.constant 0 : index
    %c0_29 = arith.constant 0 : index
    %40 = vector.load %arg9[%c0_28, %c0_29] : memref<1x2xf32, #tpu.memory_space<vmem>>, vector<1x2xf32>
    %41 = vector.broadcast %40 : vector<1x2xf32> to vector<3x2xf32>
    %42 = arith.addf %39, %41 : vector<3x2xf32>
    %c0_30 = arith.constant 0 : index
    %c0_31 = arith.constant 0 : index
    %c0_32 = arith.constant 0 : index
    %43 = vector.load %arg10[%c0_30, %c0_31, %c0_32] : memref<1x3x2xf32, #tpu.memory_space<vmem>>, vector<1x3x2xf32>
    %44 = vector.shape_cast %43 : vector<1x3x2xf32> to vector<3x2xf32>
    %45 = vector.shape_cast %42 : vector<3x2xf32> to vector<1x3x2xf32>
    tpu.vector_store %arg10[%c0_30, %c0_31, %c0_32], %45 {strides = array<i32>} : memref<1x3x2xf32, #tpu.memory_space<vmem>>, vector<1x3x2xf32>,
    return
  }
  func.func @transform_0(%arg0: i32) -> (i32, i32, i32) {
    %c0_i32 = arith.constant 0 : i32
    %c0_i32_0 = arith.constant 0 : i32
    %c0_i32_1 = arith.constant 0 : i32
    return %arg0, %c0_i32, %c0_i32_0 : i32, i32, i32
  }
  func.func @transform_1(%arg0: i32) -> (i32, i32, i32) {
    %c0_i32 = arith.constant 0 : i32
    %c0_i32_0 = arith.constant 0 : i32
    %c0_i32_1 = arith.constant 0 : i32
    return %arg0, %c0_i32, %c0_i32_0 : i32, i32, i32
  }
  func.func @transform_2(%arg0: i32) -> (i32, i32) {
    %c0_i32 = arith.constant 0 : i32
    %c0_i32_0 = arith.constant 0 : i32
    %c0_i32_1 = arith.constant 0 : i32
    return %c0_i32, %c0_i32_0 : i32, i32
  }
  func.func @transform_3(%arg0: i32) -> (i32, i32) {
    %c0_i32 = arith.constant 0 : i32
    %c0_i32_0 = arith.constant 0 : i32
    %c0_i32_1 = arith.constant 0 : i32
    return %c0_i32, %c0_i32_0 : i32, i32
  }
  func.func @transform_4(%arg0: i32) -> (i32, i32) {
    %c0_i32 = arith.constant 0 : i32
    %c0_i32_0 = arith.constant 0 : i32
    %c0_i32_1 = arith.constant 0 : i32
    return %c0_i32, %c0_i32_0 : i32, i32
  }
  func.func @transform_5(%arg0: i32) -> (i32, i32) {
    %c0_i32 = arith.constant 0 : i32
    %c0_i32_0 = arith.constant 0 : i32
    %c0_i32_1 = arith.constant 0 : i32
    return %c0_i32, %c0_i32_0 : i32, i32
  }
  func.func @transform_6(%arg0: i32) -> (i32, i32) {
    %c0_i32 = arith.constant 0 : i32
    %c0_i32_0 = arith.constant 0 : i32
    %c0_i32_1 = arith.constant 0 : i32
    return %c0_i32, %c0_i32_0 : i32, i32
  }
  func.func @transform_7(%arg0: i32) -> (i32, i32) {
    %c0_i32 = arith.constant 0 : i32
    %c0_i32_0 = arith.constant 0 : i32
    %c0_i32_1 = arith.constant 0 : i32
    return %c0_i32, %c0_i32_0 : i32, i32
  }
  func.func @transform_8(%arg0: i32) -> (i32, i32) {
    %c0_i32 = arith.constant 0 : i32
    %c0_i32_0 = arith.constant 0 : i32
    %c0_i32_1 = arith.constant 0 : i32
    return %c0_i32, %c0_i32_0 : i32, i32
  }
  func.func @transform_9(%arg0: i32) -> (i32, i32, i32) {
    %c0_i32 = arith.constant 0 : i32
    %c0_i32_0 = arith.constant 0 : i32
    %c0_i32_1 = arith.constant 0 : i32
    return %arg0, %c0_i32, %c0_i32_0 : i32, i32, i32
  }
}

</mosaic_0001>

<llo_original>
// kernel: tpu_custom_call.1
$region0: #{tpu_custom_call.1}
  #allocation0 [shape = 'u32[]', space=smem, size = 0x4, offset = 0x4, fixed_abs, tag = 'smem constant byte address 0x4 - core index']
  #allocation1 [shape = 'u32[144,128]{1,0:T(1,128)}', space=vmem, size = 0x12000, scoped, tag = 'internal scratch']
  %s0 = inlined_call_operand.hbm [shape: f32[6,8,32], index: 0, kind: input, shape index: {}]
  %s1 = inlined_call_operand.hbm [shape: f32[6,8,32], index: 1, kind: input, shape index: {}]
  %s2 = inlined_call_operand.vmem [shape: f32[32,32], index: 2, kind: input, shape index: {}]
  %s3 = inlined_call_operand.vmem [shape: f32[1,32], index: 3, kind: input, shape index: {}]
  %s4 = inlined_call_operand.hbm [shape: f32[32,32], index: 4, kind: input, shape index: {}]
  %s5 = inlined_call_operand.hbm [shape: f32[32,32], index: 5, kind: input, shape index: {}]
  %s6 = inlined_call_operand.hbm [shape: f32[32,32], index: 6, kind: input, shape index: {}]
  %s7 = inlined_call_operand.vmem [shape: f32[32,2], index: 7, kind: input, shape index: {}]
  %s8 = inlined_call_operand.vmem [shape: f32[1,2], index: 8, kind: input, shape index: {}]
  %s9 = inlined_call_operand.vmem [shape: f32[2,3,2], index: 9, kind: output, shape index: {}]
  %s10 = sld [smem:[#allocation0]]
  $region89: #{tpu_custom_call.1} parent=0
    _
  %s12 = ssub.s32 1, %s10
  %s13 = scalar_select 0, %s12, %s10
  $region1: #{tpu_custom_call.1} parent=0
    #allocation2 [shape = 'u8[24576]{0}', space=vmem, size = 0x6000, scoped, tag = 'input window, operand 0']
    #allocation3 [shape = 's32[2]{0}', space=sflag, size = 0x8, scoped, tag = 'scoped memory for tpu_custom_call.1']
    #allocation4 [shape = 'u8[24576]{0}', space=vmem, size = 0x6000, scoped, tag = 'input window, operand 1']
    #allocation5 [shape = 's32[2]{0}', space=sflag, size = 0x8, scoped, tag = 'scoped memory for tpu_custom_call.1']
    #allocation6 [shape = 'u8[16384]{0}', space=vmem, size = 0x4000, scoped, tag = 'input window, operand 4, single buffered']
    #allocation7 [shape = 'u8[16384]{0}', space=vmem, size = 0x4000, scoped, tag = 'input window, operand 5, single buffered']
    #allocation8 [shape = 's32[1]{0}', space=sflag, size = 0x4, scoped, tag = 'scoped memory for tpu_custom_call.1']
    #allocation9 [shape = 'u8[16384]{0}', space=vmem, size = 0x4000, scoped, tag = 'input window, operand 6, single buffered']
    %14 = vsyncpa [#allocation3], 0
    %s15 = scalar_lea.sflag [#allocation3], 1
    %16 = vsyncpa %s15, 0
    %17 = vsyncpa [#allocation5], 0
    %s18 = scalar_lea.sflag [#allocation5], 1
    %19 = vsyncpa %s18, 0
    %20 = vsyncpa [#allocation8], 0
    loop: start=0, step=1, limit=4
    $region2: #{tpu_custom_call.1} parent=1 // loop_pre_header
      _
    $region3: #{tpu_custom_call.1} parent=1 // loop_header
      %s22 = sphi 0, %s26
      %p23 = scmp.ge.s32.totalorder %s22, 4
      %s32 = sphi 0, %s34
      %s35 = sphi 0, %s32
      %s36 = sphi 0, %s35
      %s52 = sphi 0, %s36
      %s58 = sphi 0, %s60
      %s61 = sphi 0, %s58
      %s62 = sphi 0, %s61
      %s78 = sphi 0, %s62
      %s82 = sphi 0, %s82
      %s84 = sphi 0, %s82
      %s85 = sphi 0, %s84
      %s99 = sphi 0, %s85
      %s103 = sphi 0, %s103
      %s105 = sphi 0, %s103
      %s106 = sphi 0, %s105
      %s120 = sphi 0, %s106
      %s124 = sphi 0, %s124
      %s126 = sphi 0, %s124
      %s127 = sphi 0, %s126
      %s141 = sphi 0, %s127
      %s145 = sphi 0, %s145
      %s147 = sphi 0, %s145
      %s148 = sphi 0, %s147
      %s162 = sphi 0, %s148
      %s166 = sphi 0, %s166
      %s168 = sphi 0, %s166
      %s169 = sphi 0, %s168
      %s183 = sphi 0, %s169
      %s187 = sphi 0, %s187
      %s189 = sphi 0, %s187
      %s190 = sphi 0, %s189
      %s204 = sphi 0, %s190
      %s208 = sphi 0, %s208
      %s210 = sphi 0, %s208
      %s211 = sphi 0, %s210
      %s225 = sphi 0, %s211
      %s231 = sphi 0, %s233
      %s234 = sphi 0, %s231
      %s235 = sphi 0, %s234
      %s251 = sphi 0, %s235
    $region4: #{tpu_custom_call.1} parent=1 // loop_header_branch
      %25 = sbr.rel (%p23) target = $region8
    $region5: #{tpu_custom_call.1} parent=1 // loop_body
      %s27 = ssub.s32 %s22, 1
      %s28 = ssub.s32 %s22, 2
      %s29 = sadd.s32 %s22, 1
      %s30 = ssub.s32 %s22, %s29
      %p31 = scmp.eq.s32.totalorder %s30, 0
      %s33 = sadd.s32 %s32, 1
      %s34 = scalar_select %p31, %s32, %s33
      %p37 = pneg %p31
      %p38 = scmp.eq.s32.totalorder %s22, 1
      %p39 = por %p37, %p38
      %p40 = scmp.ne.s32.totalorder %s32, %s35
      %p41 = scmp.eq.s32.totalorder %s22, 0
      %p42 = por %p40, %p41
      %p43 = scmp.ne.s32.totalorder %s32, %s35
      %p44 = scmp.eq.s32.totalorder %s27, 1
      %p45 = por %p43, %p44
      %p46 = scmp.ne.s32.totalorder %s35, %s36
      %p47 = scmp.eq.s32.totalorder %s27, 0
      %p48 = por %p46, %p47
      %p49 = scmp.ne.s32.totalorder %s35, %s36
      %p50 = scmp.eq.s32.totalorder %s28, 1
      %p51 = por %p49, %p50
      %p53 = scmp.ne.s32.totalorder %s36, %s52
      %p54 = scmp.eq.s32.totalorder %s28, 0
      %p55 = por %p53, %p54
      %s56 = ssub.s32 %s22, %s29
      %p57 = scmp.eq.s32.totalorder %s56, 0
      %s59 = sadd.s32 %s58, 1
      %s60 = scalar_select %p57, %s58, %s59
      %p63 = pneg %p57
      %p64 = scmp.eq.s32.totalorder %s22, 1
      %p65 = por %p63, %p64
      %p66 = scmp.ne.s32.totalorder %s58, %s61
      %p67 = scmp.eq.s32.totalorder %s22, 0
      %p68 = por %p66, %p67
      %p69 = scmp.ne.s32.totalorder %s58, %s61
      %p70 = scmp.eq.s32.totalorder %s27, 1
      %p71 = por %p69, %p70
      %p72 = scmp.ne.s32.totalorder %s61, %s62
      %p73 = scmp.eq.s32.totalorder %s27, 0
      %p74 = por %p72, %p73
      %p75 = scmp.ne.s32.totalorder %s61, %s62
      %p76 = scmp.eq.s32.totalorder %s28, 1
      %p77 = por %p75, %p76
      %p79 = scmp.ne.s32.totalorder %s62, %s78
      %p80 = scmp.eq.s32.totalorder %s28, 0
      %p81 = por %p79, %p80
      %s83 = sadd.s32 %s82, 1
      %p86 = scmp.eq.s32.totalorder %s22, 1
      %p87 = scmp.ne.s32.totalorder %s82, %s84
      %p88 = scmp.eq.s32.totalorder %s22, 0
      %p89 = por %p87, %p88
      %p90 = scmp.ne.s32.totalorder %s82, %s84
      %p91 = scmp.eq.s32.totalorder %s27, 1
      %p92 = por %p90, %p91
      %p93 = scmp.ne.s32.totalorder %s84, %s85
      %p94 = scmp.eq.s32.totalorder %s27, 0
      %p95 = por %p93, %p94
      %p96 = scmp.ne.s32.totalorder %s84, %s85
      %p97 = scmp.eq.s32.totalorder %s28, 1
      %p98 = por %p96, %p97
      %p100 = scmp.ne.s32.totalorder %s85, %s99
      %p101 = scmp.eq.s32.totalorder %s28, 0
      %p102 = por %p100, %p101
      %s104 = sadd.s32 %s103, 1
      %p107 = scmp.eq.s32.totalorder %s22, 1
      %p108 = scmp.ne.s32.totalorder %s103, %s105
      %p109 = scmp.eq.s32.totalorder %s22, 0
      %p110 = por %p108, %p109
      %p111 = scmp.ne.s32.totalorder %s103, %s105
      %p112 = scmp.eq.s32.totalorder %s27, 1
      %p113 = por %p111, %p112
      %p114 = scmp.ne.s32.totalorder %s105, %s106
      %p115 = scmp.eq.s32.totalorder %s27, 0
      %p116 = por %p114, %p115
      %p117 = scmp.ne.s32.totalorder %s105, %s106
      %p118 = scmp.eq.s32.totalorder %s28, 1
      %p119 = por %p117, %p118
      %p121 = scmp.ne.s32.totalorder %s106, %s120
      %p122 = scmp.eq.s32.totalorder %s28, 0
      %p123 = por %p121, %p122
      %s125 = sadd.s32 %s124, 1
      %p128 = scmp.eq.s32.totalorder %s22, 1
      %p129 = scmp.ne.s32.totalorder %s124, %s126
      %p130 = scmp.eq.s32.totalorder %s22, 0
      %p131 = por %p129, %p130
      %p132 = scmp.ne.s32.totalorder %s124, %s126
      %p133 = scmp.eq.s32.totalorder %s27, 1
      %p134 = por %p132, %p133
      %p135 = scmp.ne.s32.totalorder %s126, %s127
      %p136 = scmp.eq.s32.totalorder %s27, 0
      %p137 = por %p135, %p136
      %p138 = scmp.ne.s32.totalorder %s126, %s127
      %p139 = scmp.eq.s32.totalorder %s28, 1
      %p140 = por %p138, %p139
      %p142 = scmp.ne.s32.totalorder %s127, %s141
      %p143 = scmp.eq.s32.totalorder %s28, 0
      %p144 = por %p142, %p143
      %s146 = sadd.s32 %s145, 1
      %p149 = scmp.eq.s32.totalorder %s22, 1
      %p150 = scmp.ne.s32.totalorder %s145, %s147
      %p151 = scmp.eq.s32.totalorder %s22, 0
      %p152 = por %p150, %p151
      %p153 = scmp.ne.s32.totalorder %s145, %s147
      %p154 = scmp.eq.s32.totalorder %s27, 1
      %p155 = por %p153, %p154
      %p156 = scmp.ne.s32.totalorder %s147, %s148
      %p157 = scmp.eq.s32.totalorder %s27, 0
      %p158 = por %p156, %p157
      %p159 = scmp.ne.s32.totalorder %s147, %s148
      %p160 = scmp.eq.s32.totalorder %s28, 1
      %p161 = por %p159, %p160
      %p163 = scmp.ne.s32.totalorder %s148, %s162
      %p164 = scmp.eq.s32.totalorder %s28, 0
      %p165 = por %p163, %p164
      %s167 = sadd.s32 %s166, 1
      %p170 = scmp.eq.s32.totalorder %s22, 1
      %p171 = scmp.ne.s32.totalorder %s166, %s168
      %p172 = scmp.eq.s32.totalorder %s22, 0
      %p173 = por %p171, %p172
      %p174 = scmp.ne.s32.totalorder %s166, %s168
      %p175 = scmp.eq.s32.totalorder %s27, 1
      %p176 = por %p174, %p175
      %p177 = scmp.ne.s32.totalorder %s168, %s169
      %p178 = scmp.eq.s32.totalorder %s27, 0
      %p179 = por %p177, %p178
      %p180 = scmp.ne.s32.totalorder %s168, %s169
      %p181 = scmp.eq.s32.totalorder %s28, 1
      %p182 = por %p180, %p181
      %p184 = scmp.ne.s32.totalorder %s169, %s183
      %p185 = scmp.eq.s32.totalorder %s28, 0
      %p186 = por %p184, %p185
      %s188 = sadd.s32 %s187, 1
      %p191 = scmp.eq.s32.totalorder %s22, 1
      %p192 = scmp.ne.s32.totalorder %s187, %s189
      %p193 = scmp.eq.s32.totalorder %s22, 0
      %p194 = por %p192, %p193
      %p195 = scmp.ne.s32.totalorder %s187, %s189
      %p196 = scmp.eq.s32.totalorder %s27, 1
      %p197 = por %p195, %p196
      %p198 = scmp.ne.s32.totalorder %s189, %s190
      %p199 = scmp.eq.s32.totalorder %s27, 0
      %p200 = por %p198, %p199
      %p201 = scmp.ne.s32.totalorder %s189, %s190
      %p202 = scmp.eq.s32.totalorder %s28, 1
      %p203 = por %p201, %p202
      %p205 = scmp.ne.s32.totalorder %s190, %s204
      %p206 = scmp.eq.s32.totalorder %s28, 0
      %p207 = por %p205, %p206
      %s209 = sadd.s32 %s208, 1
      %p212 = scmp.eq.s32.totalorder %s22, 1
      %p213 = scmp.ne.s32.totalorder %s208, %s210
      %p214 = scmp.eq.s32.totalorder %s22, 0
      %p215 = por %p213, %p214
      %p216 = scmp.ne.s32.totalorder %s208, %s210
      %p217 = scmp.eq.s32.totalorder %s27, 1
      %p218 = por %p216, %p217
      %p219 = scmp.ne.s32.totalorder %s210, %s211
      %p220 = scmp.eq.s32.totalorder %s27, 0
      %p221 = por %p219, %p220
      %p222 = scmp.ne.s32.totalorder %s210, %s211
      %p223 = scmp.eq.s32.totalorder %s28, 1
      %p224 = por %p222, %p223
      %p226 = scmp.ne.s32.totalorder %s211, %s225
      %p227 = scmp.eq.s32.totalorder %s28, 0
      %p228 = por %p226, %p227
      %s229 = ssub.s32 %s22, %s29
      %p230 = scmp.eq.s32.totalorder %s229, 0
      %s232 = sadd.s32 %s231, 1
      %s233 = scalar_select %p230, %s231, %s232
      %p236 = pneg %p230
      %p237 = scmp.eq.s32.totalorder %s22, 1
      %p238 = por %p236, %p237
      %p239 = scmp.ne.s32.totalorder %s231, %s234
      %p240 = scmp.eq.s32.totalorder %s22, 0
      %p241 = por %p239, %p240
      %p242 = scmp.ne.s32.totalorder %s231, %s234
      %p243 = scmp.eq.s32.totalorder %s27, 1
      %p244 = por %p242, %p243
      %p245 = scmp.ne.s32.totalorder %s234, %s235
      %p246 = scmp.eq.s32.totalorder %s27, 0
      %p247 = por %p245, %p246
      %p248 = scmp.ne.s32.totalorder %s234, %s235
      %p249 = scmp.eq.s32.totalorder %s28, 1
      %p250 = por %p248, %p249
      %p252 = scmp.ne.s32.totalorder %s235, %s251
      %p253 = scmp.eq.s32.totalorder %s28, 0
      %p254 = por %p252, %p253
      %p255 = scmp.le.s32.totalorder 1, %s22
      %p256 = scmp.lt.s32.totalorder %s22, 3
      %p257 = pnand %p255, %p256
      %p258 = pneg %p257
      // Predicated region
      $region9: #{tpu_custom_call.1} parent=5 // pred_check
        _
      $region10: #{tpu_custom_call.1} parent=5 // pred_check_branch
        %260 = sbr.rel (%p257) target = $region12
      $region11: #{tpu_custom_call.1} parent=5 // pred_region
        %s261 = ssub.s32 %s22, 1
        // Predicated region
        $region13: #{tpu_custom_call.1} parent=11 // pred_check
          %p262 = pneg %p95
        $region14: #{tpu_custom_call.1} parent=11 // pred_check_branch
          %264 = sbr.rel (%p262) target = $region16
        $region15: #{tpu_custom_call.1} parent=11 // pred_region
          _
        $region16: #{tpu_custom_call.1} parent=11 // pred_fallthru
          _
        // Predicated region
        $region17: #{tpu_custom_call.1} parent=11 // pred_check
          %p265 = pneg %p116
        $region18: #{tpu_custom_call.1} parent=11 // pred_check_branch
          %267 = sbr.rel (%p265) target = $region20
        $region19: #{tpu_custom_call.1} parent=11 // pred_region
          _
        $region20: #{tpu_custom_call.1} parent=11 // pred_fallthru
          _
        // Predicated region
        $region21: #{tpu_custom_call.1} parent=11 // pred_check
          %p268 = pneg %p137
        $region22: #{tpu_custom_call.1} parent=11 // pred_check_branch
          %270 = sbr.rel (%p268) target = $region24
        $region23: #{tpu_custom_call.1} parent=11 // pred_region
          %s272 = ssub.s32 512, 512
          %273 = vsyncadd [#allocation5], %s272
          %s274 = sshll.u32 [#allocation6], 4
          %s275 = int_to_ptr.vmem [resolvable:$true] %s274
          %280 = dma.hbm_to_vmem [thread:$0]  %s4, 512, %s275, [#allocation5], 128, 128, 8
        $region24: #{tpu_custom_call.1} parent=11 // pred_fallthru
          _
        // Predicated region
        $region25: #{tpu_custom_call.1} parent=11 // pred_check
          %p281 = pneg %p158
        $region26: #{tpu_custom_call.1} parent=11 // pred_check_branch
          %283 = sbr.rel (%p281) target = $region28
        $region27: #{tpu_custom_call.1} parent=11 // pred_region
          %s285 = ssub.s32 512, 512
          %286 = vsyncadd [#allocation8], %s285
          %s287 = sshll.u32 [#allocation7], 4
          %s288 = int_to_ptr.vmem [resolvable:$true] %s287
          %293 = dma.hbm_to_vmem [thread:$0]  %s5, 512, %s288, [#allocation8], 128, 128, 8
        $region28: #{tpu_custom_call.1} parent=11 // pred_fallthru
          _
        // Predicated region
        $region29: #{tpu_custom_call.1} parent=11 // pred_check
          %p294 = pneg %p179
        $region30: #{tpu_custom_call.1} parent=11 // pred_check_branch
          %296 = sbr.rel (%p294) target = $region32
        $region31: #{tpu_custom_call.1} parent=11 // pred_region
          %s298 = ssub.s32 512, 512
          %299 = vsyncadd [#allocation8], %s298
          %s300 = sshll.u32 [#allocation9], 4
          %s301 = int_to_ptr.vmem [resolvable:$true] %s300
          %306 = dma.hbm_to_vmem [thread:$0]  %s6, 512, %s301, [#allocation8], 128, 128, 8
        $region32: #{tpu_custom_call.1} parent=11 // pred_fallthru
          _
        // Predicated region
        $region33: #{tpu_custom_call.1} parent=11 // pred_check
          %p307 = pneg %p200
        $region34: #{tpu_custom_call.1} parent=11 // pred_check_branch
          %309 = sbr.rel (%p307) target = $region36
        $region35: #{tpu_custom_call.1} parent=11 // pred_region
          _
        $region36: #{tpu_custom_call.1} parent=11 // pred_fallthru
          _
        // Predicated region
        $region37: #{tpu_custom_call.1} parent=11 // pred_check
          %p310 = pneg %p221
        $region38: #{tpu_custom_call.1} parent=11 // pred_check_branch
          %312 = sbr.rel (%p310) target = $region40
        $region39: #{tpu_custom_call.1} parent=11 // pred_region
          _
        $region40: #{tpu_custom_call.1} parent=11 // pred_fallthru
          _
      $region12: #{tpu_custom_call.1} parent=5 // pred_fallthru
        _
      %p313 = scmp.lt.s32.totalorder %s22, 2
      // Predicated region
      $region41: #{tpu_custom_call.1} parent=5 // pred_check
        %p314 = pneg %p313
      $region42: #{tpu_custom_call.1} parent=5 // pred_check_branch
        %316 = sbr.rel (%p314) target = $region44
      $region43: #{tpu_custom_call.1} parent=5 // pred_region
        // Predicated region
        $region45: #{tpu_custom_call.1} parent=43 // pred_check
          %p317 = pneg %p42
        $region46: #{tpu_custom_call.1} parent=43 // pred_check_branch
          %319 = sbr.rel (%p317) target = $region48
        $region47: #{tpu_custom_call.1} parent=43 // pred_region
          %s320 = sand.u32 %s32, 1
          %s321 = scalar_lea.sflag [#allocation3], %s320
          %s322 = sand.u32 %s32, 1
          %s323 = smul.addr %s322, 24
          %s324 = scalar_lea.vmem [#allocation2], %s323
          %s325 = smul.u32 3, %s22
          %s327 = ssub.s32 384, 384
          %328 = vsyncadd %s321, %s327
          %s329 = smul.addr %s325, 128
          %s330 = scalar_lea.hbm %s0, %s329
          %s331 = sshll.u32 %s324, 4
          %s332 = int_to_ptr.vmem [resolvable:$true] %s331
          %337 = dma.hbm_to_vmem [thread:$0]  %s330, 384, %s332, %s321, 128, 128, 8
        $region48: #{tpu_custom_call.1} parent=43 // pred_fallthru
          _
        // Predicated region
        $region49: #{tpu_custom_call.1} parent=43 // pred_check
          %p338 = pneg %p68
        $region50: #{tpu_custom_call.1} parent=43 // pred_check_branch
          %340 = sbr.rel (%p338) target = $region52
        $region51: #{tpu_custom_call.1} parent=43 // pred_region
          %s341 = sand.u32 %s22, 1
          %s342 = scalar_lea.sflag [#allocation5], %s341
          %s343 = sand.u32 %s58, 1
          %s344 = smul.addr %s343, 24
          %s345 = scalar_lea.vmem [#allocation4], %s344
          %s346 = smul.u32 3, %s22
          %s348 = ssub.s32 384, 384
          %349 = vsyncadd %s342, %s348
          %s350 = smul.addr %s346, 128
          %s351 = scalar_lea.hbm %s1, %s350
          %s352 = sshll.u32 %s345, 4
          %s353 = int_to_ptr.vmem [resolvable:$true] %s352
          %358 = dma.hbm_to_vmem [thread:$0]  %s351, 384, %s353, %s342, 128, 128, 8
        $region52: #{tpu_custom_call.1} parent=43 // pred_fallthru
          _
      $region44: #{tpu_custom_call.1} parent=5 // pred_fallthru
        _
      %p359 = scmp.le.s32.totalorder 1, %s22
      %p360 = scmp.lt.s32.totalorder %s22, 3
      %p361 = pnand %p359, %p360
      %p362 = pneg %p361
      // Predicated region
      $region53: #{tpu_custom_call.1} parent=5 // pred_check
        _
      $region54: #{tpu_custom_call.1} parent=5 // pred_check_branch
        %364 = sbr.rel (%p361) target = $region56
      $region55: #{tpu_custom_call.1} parent=5 // pred_region
        %s365 = ssub.s32 %s22, 1
        %s366 = sand.u32 %s35, 1
        %s367 = scalar_lea.sflag [#allocation3], %s366
        %s368 = sand.u32 %s35, 1
        %s369 = smul.addr %s368, 24
        %s370 = scalar_lea.vmem [#allocation2], %s369
        // Predicated region
        $region57: #{tpu_custom_call.1} parent=55 // pred_check
          %p371 = pneg %p48
        $region58: #{tpu_custom_call.1} parent=55 // pred_check_branch
          %373 = sbr.rel (%p371) target = $region60
        $region59: #{tpu_custom_call.1} parent=55 // pred_region
          %374 = dma.done %s367, 384
        $region60: #{tpu_custom_call.1} parent=55 // pred_fallthru
          _
        %s375 = sand.u32 %s27, 1
        %s376 = scalar_lea.sflag [#allocation5], %s375
        %s377 = sand.u32 %s61, 1
        %s378 = smul.addr %s377, 24
        %s379 = scalar_lea.vmem [#allocation4], %s378
        // Predicated region
        $region61: #{tpu_custom_call.1} parent=55 // pred_check
          %p380 = pneg %p74
        $region62: #{tpu_custom_call.1} parent=55 // pred_check_branch
          %382 = sbr.rel (%p380) target = $region64
        $region63: #{tpu_custom_call.1} parent=55 // pred_region
          %383 = dma.done %s376, 384
        $region64: #{tpu_custom_call.1} parent=55 // pred_fallthru
          _
        // Predicated region
        $region65: #{tpu_custom_call.1} parent=55 // pred_check
          %p384 = pneg %p137
        $region66: #{tpu_custom_call.1} parent=55 // pred_check_branch
          %386 = sbr.rel (%p384) target = $region68
        $region67: #{tpu_custom_call.1} parent=55 // pred_region
          %387 = dma.done [#allocation5], 512
        $region68: #{tpu_custom_call.1} parent=55 // pred_fallthru
          _
        // Predicated region
        $region69: #{tpu_custom_call.1} parent=55 // pred_check
          %p388 = pneg %p158
        $region70: #{tpu_custom_call.1} parent=55 // pred_check_branch
          %390 = sbr.rel (%p388) target = $region72
        $region71: #{tpu_custom_call.1} parent=55 // pred_region
          %391 = dma.done [#allocation8], 512
        $region72: #{tpu_custom_call.1} parent=55 // pred_fallthru
          _
        // Predicated region
        $region73: #{tpu_custom_call.1} parent=55 // pred_check
          %p392 = pneg %p179
        $region74: #{tpu_custom_call.1} parent=55 // pred_check_branch
          %394 = sbr.rel (%p392) target = $region76
        $region75: #{tpu_custom_call.1} parent=55 // pred_region
          %395 = dma.done [#allocation8], 512
        $region76: #{tpu_custom_call.1} parent=55 // pred_fallthru
          _
        %s396 = sand.u32 %s35, 1
        %s397 = scalar_lea.sflag [#allocation3], %s396
        %s398 = sand.u32 %s35, 1
        %s399 = smul.addr %s398, 24
        %s400 = scalar_lea.vmem [#allocation2], %s399
        %p401 = pneg %p48
        %p402 = pneg %p45
        %s403 = sand.u32 %s27, 1
        %s404 = scalar_lea.sflag [#allocation5], %s403
        %s405 = sand.u32 %s61, 1
        %s406 = smul.addr %s405, 24
        %s407 = scalar_lea.vmem [#allocation4], %s406
        %p408 = pneg %p74
        %p409 = pneg %p71
        %p410 = pneg %p95
        %p411 = pneg %p92
        %p412 = pneg %p116
        %p413 = pneg %p113
        %p414 = pneg %p137
        %p415 = pneg %p134
        %p416 = pneg %p158
        %p417 = pneg %p155
        %p418 = pneg %p179
        %p419 = pneg %p176
        %p420 = pneg %p200
        %p421 = pneg %p197
        %p422 = pneg %p221
        %p423 = pneg %p218
        %p424 = pneg %p247
        %p425 = pneg %p244
        %p426 = scmp.lt.s32.totalorder %s27, 1
        %s427 = scalar_select %p426, %s27, 1
        %s428 = smul.addr %s427, 4
        %s429 = scalar_lea.vmem %s9, %s428
        %s430 = smul.u32 3, %s27
        %s431 = smul.u32 3, %s27
        %p432 = scmp.lt.s32.totalorder %s27, 1
        %s433 = scalar_select %p432, %s27, 1
        %s434 = smul.addr %s433, 4
        %s435 = scalar_lea.vmem %s9, %s434
        %v436 = vld [vmem:[%s370] sm:$0xff]
        %v437 = vld [vmem:[%s370 + $0x8] sm:$0xff]
        %v438 = vld [vmem:[%s370 + $0x10] sm:$0xff]
        %v439 = vld [vmem:[%s379] sm:$0xff]
        %v440 = vld [vmem:[%s379 + $0x8] sm:$0xff]
        %v441 = vld [vmem:[%s379 + $0x10] sm:$0xff]
        %v442 = vld [vmem:[%s2] sm:$0xff]
        %v443 = vld [vmem:[%s2 + $0x8] sm:$0xff]
        %v444 = vld [vmem:[%s2 + $0x10] sm:$0xff]
        %v445 = vld [vmem:[%s2 + $0x18] sm:$0xff]
        %v446 = vld [vmem:[%s3] sm:$0x1]
        %v448 = vlaneseq
        %v449 = vshrl.u32 %v448, 7
        %v450 = vsub.s32 0, %v449
        %v451 = vrot.slane %v446, %v450
        %vm453 = vcmask 261120
        %v455 = vsel %vm453, %v439, 0
        %v458 = vsel %vm453, %v440, 0
        %v461 = vsel %vm453, %v441, 0
        %463 = vmatprep.subr.mxu0 0.0
        %464 = vmatpush1.msra.mxu0 %v442
        %465 = vmatprep.subr.mxu0 0.0
        %466 = vmatpush1.msra.mxu0 %v443
        %467 = vmatprep.subr.mxu0 0.0
        %468 = vmatpush1.msra.mxu0 %v444
        %469 = vmatprep.subr.mxu0 0.0
        %470 = vmatpush1.msra.mxu0 %v445
        %471 = vmatprep.subr.mxu0 0.0
        %472 = vmatpush1.msra.mxu0 0.0
        %473 = vmatprep.subr.mxu0 0.0
        %474 = vmatpush1.msra.mxu0 0.0
        %475 = vmatprep.subr.mxu0 0.0
        %476 = vmatpush1.msra.mxu0 0.0
        %477 = vmatprep.subr.mxu0 0.0
        %478 = vmatpush1.msra.mxu0 0.0
        %479 = vmatprep.subr.mxu0 0.0
        %480 = vmatpush1.msra.mxu0 0.0
        %481 = vmatprep.subr.mxu0 0.0
        %482 = vmatpush1.msra.mxu0 0.0
        %483 = vmatprep.subr.mxu0 0.0
        %484 = vmatpush1.msra.mxu0 0.0
        %485 = vmatprep.subr.mxu0 0.0
        %486 = vmatpush1.msra.mxu0 0.0
        %487 = vmatprep.subr.mxu0 0.0
        %488 = vmatpush1.msra.mxu0 0.0
        %489 = vmatprep.subr.mxu0 0.0
        %490 = vmatpush1.msra.mxu0 0.0
        %491 = vmatprep.subr.mxu0 0.0
        %492 = vmatpush1.msra.mxu0 0.0
        %493 = vmatprep.subr.mxu0 0.0
        %494 = vmatpush1.msra.mxu0 0.0
        %495 = vmatprep.subr.mxu0 0.0
        %496 = vmatpush1.msra.mxu0 0.0
        %497 = vmatprep.subr.mxu0 0.0
        %498 = vmatpush1.msra.mxu0 0.0
        %499 = vmatprep.subr.mxu0 0.0
        %500 = vmatpush1.msra.mxu0 0.0
        %501 = vmatprep.subr.mxu0 0.0
        %502 = vmatpush1.msra.mxu0 0.0
        %503 = vmatprep.subr.mxu0 0.0
        %504 = vmatpush1.msra.mxu0 0.0
        %505 = vmatprep.subr.mxu0 0.0
        %506 = vmatpush1.msra.mxu0 0.0
        %507 = vmatprep.subr.mxu0 0.0
        %508 = vmatpush1.msra.mxu0 0.0
        %509 = vmatprep.subr.mxu0 0.0
        %510 = vmatpush1.msra.mxu0 0.0
        %511 = vmatprep.subr.mxu0 0.0
        %512 = vmatpush1.msra.mxu0 0.0
        %513 = vmatprep.subr.mxu0 0.0
        %514 = vmatpush1.msra.mxu0 0.0
        %515 = vmatprep.subr.mxu0 0.0
        %516 = vmatpush1.msra.mxu0 0.0
        %517 = vmatprep.subr.mxu0 0.0
        %518 = vmatpush1.msra.mxu0 0.0
        %519 = vmatprep.subr.mxu0 0.0
        %520 = vmatpush1.msra.mxu0 0.0
        %521 = vmatprep.subr.mxu0 0.0
        %522 = vmatpush1.msra.mxu0 0.0
        %523 = vmatprep.subr.mxu0 0.0
        %524 = vmatpush1.msra.mxu0 0.0
        %525 = vmatprep.subr.mxu0 0.0
        %526 = vmatpush1.msra.mxu0 0.0
        %527 = vmatprep.mubr.f32.mxu0 0.0
        %528 = vmatmul.mubr.f32.gmra.mrb[0].mxu0 %v455
        %v529 = vpop.f32.mrb[0].mxu0
        %v530 = vadd.f32 %v451, %v529
        %v531 = vpop.f32.mrb[0].mxu0
        %532 = vmatprep.mubr.f32.mxu0 0.0
        %533 = vmatmul.mubr.f32.gmra.mrb[0].mxu0 %v458
        %v534 = vpop.f32.mrb[0].mxu0
        %v535 = vadd.f32 %v451, %v534
        %v536 = vpop.f32.mrb[0].mxu0
        %537 = vmatprep.mubr.f32.mxu0 0.0
        %538 = vmatmul.mubr.f32.gmra.mrb[0].mxu0 %v461
        %v539 = vpop.f32.mrb[0].mxu0
        %v540 = vadd.f32 %v451, %v539
        %v541 = vpop.f32.mrb[0].mxu0
        %542 = vdwg.mxu0
        %v543 = vtanh.pop %v530
        %v544 = vtanh.pop %v535
        %v545 = vtanh.pop %v540
        %v546 = vld [vmem:[#allocation6] sm:$0xff]
        %v547 = vld [vmem:[#allocation6 + $0x8] sm:$0xff]
        %v548 = vld [vmem:[#allocation6 + $0x10] sm:$0xff]
        %v549 = vld [vmem:[#allocation6 + $0x18] sm:$0xff]
        %v551 = vsel %vm453, %v436, 0
        %v554 = vsel %vm453, %v437, 0
        %v557 = vsel %vm453, %v438, 0
        %559 = vmatprep.subr.mxu0 0.0
        %560 = vmatpush1.msra.mxu0 %v546
        %561 = vmatprep.subr.mxu0 0.0
        %562 = vmatpush1.msra.mxu0 %v547
        %563 = vmatprep.subr.mxu0 0.0
        %564 = vmatpush1.msra.mxu0 %v548
        %565 = vmatprep.subr.mxu0 0.0
        %566 = vmatpush1.msra.mxu0 %v549
        %567 = vmatprep.subr.mxu0 0.0
        %568 = vmatpush1.msra.mxu0 0.0
        %569 = vmatprep.subr.mxu0 0.0
        %570 = vmatpush1.msra.mxu0 0.0
        %571 = vmatprep.subr.mxu0 0.0
        %572 = vmatpush1.msra.mxu0 0.0
        %573 = vmatprep.subr.mxu0 0.0
        %574 = vmatpush1.msra.mxu0 0.0
        %575 = vmatprep.subr.mxu0 0.0
        %576 = vmatpush1.msra.mxu0 0.0
        %577 = vmatprep.subr.mxu0 0.0
        %578 = vmatpush1.msra.mxu0 0.0
        %579 = vmatprep.subr.mxu0 0.0
        %580 = vmatpush1.msra.mxu0 0.0
        %581 = vmatprep.subr.mxu0 0.0
        %582 = vmatpush1.msra.mxu0 0.0
        %583 = vmatprep.subr.mxu0 0.0
        %584 = vmatpush1.msra.mxu0 0.0
        %585 = vmatprep.subr.mxu0 0.0
        %586 = vmatpush1.msra.mxu0 0.0
        %587 = vmatprep.subr.mxu0 0.0
        %588 = vmatpush1.msra.mxu0 0.0
        %589 = vmatprep.subr.mxu0 0.0
        %590 = vmatpush1.msra.mxu0 0.0
        %591 = vmatprep.subr.mxu0 0.0
        %592 = vmatpush1.msra.mxu0 0.0
        %593 = vmatprep.subr.mxu0 0.0
        %594 = vmatpush1.msra.mxu0 0.0
        %595 = vmatprep.subr.mxu0 0.0
        %596 = vmatpush1.msra.mxu0 0.0
        %597 = vmatprep.subr.mxu0 0.0
        %598 = vmatpush1.msra.mxu0 0.0
        %599 = vmatprep.subr.mxu0 0.0
        %600 = vmatpush1.msra.mxu0 0.0
        %601 = vmatprep.subr.mxu0 0.0
        %602 = vmatpush1.msra.mxu0 0.0
        %603 = vmatprep.subr.mxu0 0.0
        %604 = vmatpush1.msra.mxu0 0.0
        %605 = vmatprep.subr.mxu0 0.0
        %606 = vmatpush1.msra.mxu0 0.0
        %607 = vmatprep.subr.mxu0 0.0
        %608 = vmatpush1.msra.mxu0 0.0
        %609 = vmatprep.subr.mxu0 0.0
        %610 = vmatpush1.msra.mxu0 0.0
        %611 = vmatprep.subr.mxu0 0.0
        %612 = vmatpush1.msra.mxu0 0.0
        %613 = vmatprep.subr.mxu0 0.0
        %614 = vmatpush1.msra.mxu0 0.0
        %615 = vmatprep.subr.mxu0 0.0
        %616 = vmatpush1.msra.mxu0 0.0
        %617 = vmatprep.subr.mxu0 0.0
        %618 = vmatpush1.msra.mxu0 0.0
        %619 = vmatprep.subr.mxu0 0.0
        %620 = vmatpush1.msra.mxu0 0.0
        %621 = vmatprep.subr.mxu0 0.0
        %622 = vmatpush1.msra.mxu0 0.0
        %623 = vmatprep.mubr.f32.mxu0 0.0
        %624 = vmatmul.mubr.f32.gmra.mrb[0].mxu0 %v551
        %v625 = vpop.f32.mrb[0].mxu0
        %v626 = vadd.f32 0.0, %v625
        %v627 = vpop.f32.mrb[0].mxu0
        %628 = vmatprep.mubr.f32.mxu0 0.0
        %629 = vmatmul.mubr.f32.gmra.mrb[0].mxu0 %v554
        %v630 = vpop.f32.mrb[0].mxu0
        %v631 = vadd.f32 0.0, %v630
        %v632 = vpop.f32.mrb[0].mxu0
        %633 = vmatprep.mubr.f32.mxu0 0.0
        %634 = vmatmul.mubr.f32.gmra.mrb[0].mxu0 %v557
        %v635 = vpop.f32.mrb[0].mxu0
        %v636 = vadd.f32 0.0, %v635
        %v637 = vpop.f32.mrb[0].mxu0
        %638 = vdwg.mxu0
        %v639 = vld [vmem:[#allocation7] sm:$0xff]
        %v640 = vld [vmem:[#allocation7 + $0x8] sm:$0xff]
        %v641 = vld [vmem:[#allocation7 + $0x10] sm:$0xff]
        %v642 = vld [vmem:[#allocation7 + $0x18] sm:$0xff]
        %v644 = vsel %vm453, %v543, 0
        %v647 = vsel %vm453, %v544, 0
        %v650 = vsel %vm453, %v545, 0
        %652 = vmatprep.subr.mxu0 0.0
        %653 = vmatpush1.msra.mxu0 %v639
        %654 = vmatprep.subr.mxu0 0.0
        %655 = vmatpush1.msra.mxu0 %v640
        %656 = vmatprep.subr.mxu0 0.0
        %657 = vmatpush1.msra.mxu0 %v641
        %658 = vmatprep.subr.mxu0 0.0
        %659 = vmatpush1.msra.mxu0 %v642
        %660 = vmatprep.subr.mxu0 0.0
        %661 = vmatpush1.msra.mxu0 0.0
        %662 = vmatprep.subr.mxu0 0.0
        %663 = vmatpush1.msra.mxu0 0.0
        %664 = vmatprep.subr.mxu0 0.0
        %665 = vmatpush1.msra.mxu0 0.0
        %666 = vmatprep.subr.mxu0 0.0
        %667 = vmatpush1.msra.mxu0 0.0
        %668 = vmatprep.subr.mxu0 0.0
        %669 = vmatpush1.msra.mxu0 0.0
        %670 = vmatprep.subr.mxu0 0.0
        %671 = vmatpush1.msra.mxu0 0.0
        %672 = vmatprep.subr.mxu0 0.0
        %673 = vmatpush1.msra.mxu0 0.0
        %674 = vmatprep.subr.mxu0 0.0
        %675 = vmatpush1.msra.mxu0 0.0
        %676 = vmatprep.subr.mxu0 0.0
        %677 = vmatpush1.msra.mxu0 0.0
        %678 = vmatprep.subr.mxu0 0.0
        %679 = vmatpush1.msra.mxu0 0.0
        %680 = vmatprep.subr.mxu0 0.0
        %681 = vmatpush1.msra.mxu0 0.0
        %682 = vmatprep.subr.mxu0 0.0
        %683 = vmatpush1.msra.mxu0 0.0
        %684 = vmatprep.subr.mxu0 0.0
        %685 = vmatpush1.msra.mxu0 0.0
        %686 = vmatprep.subr.mxu0 0.0
        %687 = vmatpush1.msra.mxu0 0.0
        %688 = vmatprep.subr.mxu0 0.0
        %689 = vmatpush1.msra.mxu0 0.0
        %690 = vmatprep.subr.mxu0 0.0
        %691 = vmatpush1.msra.mxu0 0.0
        %692 = vmatprep.subr.mxu0 0.0
        %693 = vmatpush1.msra.mxu0 0.0
        %694 = vmatprep.subr.mxu0 0.0
        %695 = vmatpush1.msra.mxu0 0.0
        %696 = vmatprep.subr.mxu0 0.0
        %697 = vmatpush1.msra.mxu0 0.0
        %698 = vmatprep.subr.mxu0 0.0
        %699 = vmatpush1.msra.mxu0 0.0
        %700 = vmatprep.subr.mxu0 0.0
        %701 = vmatpush1.msra.mxu0 0.0
        %702 = vmatprep.subr.mxu0 0.0
        %703 = vmatpush1.msra.mxu0 0.0
        %704 = vmatprep.subr.mxu0 0.0
        %705 = vmatpush1.msra.mxu0 0.0
        %706 = vmatprep.subr.mxu0 0.0
        %707 = vmatpush1.msra.mxu0 0.0
        %708 = vmatprep.subr.mxu0 0.0
        %709 = vmatpush1.msra.mxu0 0.0
        %710 = vmatprep.subr.mxu0 0.0
        %711 = vmatpush1.msra.mxu0 0.0
        %712 = vmatprep.subr.mxu0 0.0
        %713 = vmatpush1.msra.mxu0 0.0
        %714 = vmatprep.subr.mxu0 0.0
        %715 = vmatpush1.msra.mxu0 0.0
        %716 = vmatprep.mubr.f32.mxu0 0.0
        %717 = vmatmul.mubr.f32.gmra.mrb[0].mxu0 %v644
        %v718 = vpop.f32.mrb[0].mxu0
        %v719 = vadd.f32 0.0, %v718
        %v720 = vpop.f32.mrb[0].mxu0
        %721 = vmatprep.mubr.f32.mxu0 0.0
        %722 = vmatmul.mubr.f32.gmra.mrb[0].mxu0 %v647
        %v723 = vpop.f32.mrb[0].mxu0
        %v724 = vadd.f32 0.0, %v723
        %v725 = vpop.f32.mrb[0].mxu0
        %726 = vmatprep.mubr.f32.mxu0 0.0
        %727 = vmatmul.mubr.f32.gmra.mrb[0].mxu0 %v650
        %v728 = vpop.f32.mrb[0].mxu0
        %v729 = vadd.f32 0.0, %v728
        %v730 = vpop.f32.mrb[0].mxu0
        %731 = vdwg.mxu0
        %v732 = vld [vmem:[#allocation9] sm:$0xff]
        %v733 = vld [vmem:[#allocation9 + $0x8] sm:$0xff]
        %v734 = vld [vmem:[#allocation9 + $0x10] sm:$0xff]
        %v735 = vld [vmem:[#allocation9 + $0x18] sm:$0xff]
        %736 = vmatprep.subr.mxu0 0.0
        %737 = vmatpush1.msra.mxu0 %v732
        %738 = vmatprep.subr.mxu0 0.0
        %739 = vmatpush1.msra.mxu0 %v733
        %740 = vmatprep.subr.mxu0 0.0
        %741 = vmatpush1.msra.mxu0 %v734
        %742 = vmatprep.subr.mxu0 0.0
        %743 = vmatpush1.msra.mxu0 %v735
        %744 = vmatprep.subr.mxu0 0.0
        %745 = vmatpush1.msra.mxu0 0.0
        %746 = vmatprep.subr.mxu0 0.0
        %747 = vmatpush1.msra.mxu0 0.0
        %748 = vmatprep.subr.mxu0 0.0
        %749 = vmatpush1.msra.mxu0 0.0
        %750 = vmatprep.subr.mxu0 0.0
        %751 = vmatpush1.msra.mxu0 0.0
        %752 = vmatprep.subr.mxu0 0.0
        %753 = vmatpush1.msra.mxu0 0.0
        %754 = vmatprep.subr.mxu0 0.0
        %755 = vmatpush1.msra.mxu0 0.0
        %756 = vmatprep.subr.mxu0 0.0
        %757 = vmatpush1.msra.mxu0 0.0
        %758 = vmatprep.subr.mxu0 0.0
        %759 = vmatpush1.msra.mxu0 0.0
        %760 = vmatprep.subr.mxu0 0.0
        %761 = vmatpush1.msra.mxu0 0.0
        %762 = vmatprep.subr.mxu0 0.0
        %763 = vmatpush1.msra.mxu0 0.0
        %764 = vmatprep.subr.mxu0 0.0
        %765 = vmatpush1.msra.mxu0 0.0
        %766 = vmatprep.subr.mxu0 0.0
        %767 = vmatpush1.msra.mxu0 0.0
        %768 = vmatprep.subr.mxu0 0.0
        %769 = vmatpush1.msra.mxu0 0.0
        %770 = vmatprep.subr.mxu0 0.0
        %771 = vmatpush1.msra.mxu0 0.0
        %772 = vmatprep.subr.mxu0 0.0
        %773 = vmatpush1.msra.mxu0 0.0
        %774 = vmatprep.subr.mxu0 0.0
        %775 = vmatpush1.msra.mxu0 0.0
        %776 = vmatprep.subr.mxu0 0.0
        %777 = vmatpush1.msra.mxu0 0.0
        %778 = vmatprep.subr.mxu0 0.0
        %779 = vmatpush1.msra.mxu0 0.0
        %780 = vmatprep.subr.mxu0 0.0
        %781 = vmatpush1.msra.mxu0 0.0
        %782 = vmatprep.subr.mxu0 0.0
        %783 = vmatpush1.msra.mxu0 0.0
        %784 = vmatprep.subr.mxu0 0.0
        %785 = vmatpush1.msra.mxu0 0.0
        %786 = vmatprep.subr.mxu0 0.0
        %787 = vmatpush1.msra.mxu0 0.0
        %788 = vmatprep.subr.mxu0 0.0
        %789 = vmatpush1.msra.mxu0 0.0
        %790 = vmatprep.subr.mxu0 0.0
        %791 = vmatpush1.msra.mxu0 0.0
        %792 = vmatprep.subr.mxu0 0.0
        %793 = vmatpush1.msra.mxu0 0.0
        %794 = vmatprep.subr.mxu0 0.0
        %795 = vmatpush1.msra.mxu0 0.0
        %796 = vmatprep.subr.mxu0 0.0
        %797 = vmatpush1.msra.mxu0 0.0
        %798 = vmatprep.subr.mxu0 0.0
        %799 = vmatpush1.msra.mxu0 0.0
        %800 = vmatprep.mubr.f32.mxu0 0.0
        %801 = vmatmul.mubr.f32.gmra.mrb[0].mxu0 %v644
        %v802 = vpop.f32.mrb[0].mxu0
        %v803 = vadd.f32 0.0, %v802
        %v804 = vpop.f32.mrb[0].mxu0
        %805 = vmatprep.mubr.f32.mxu0 0.0
        %806 = vmatmul.mubr.f32.gmra.mrb[0].mxu0 %v647
        %v807 = vpop.f32.mrb[0].mxu0
        %v808 = vadd.f32 0.0, %v807
        %v809 = vpop.f32.mrb[0].mxu0
        %810 = vmatprep.mubr.f32.mxu0 0.0
        %811 = vmatmul.mubr.f32.gmra.mrb[0].mxu0 %v650
        %v812 = vpop.f32.mrb[0].mxu0
        %v813 = vadd.f32 0.0, %v812
        %v814 = vpop.f32.mrb[0].mxu0
        %815 = vdwg.mxu0
        %v817 = vsel %vm453, %v626, 0
        %v820 = vsel %vm453, %v719, 0
        %822 = vmatprep.subr.mxu0 0.0
        %823 = vmatpush1.xpose.msra.mxu0 %v820
        %824 = vmatprep.subr.mxu0 0.0
        %825 = vmatpush1.xpose.msra.mxu0 0.0
        %826 = vmatprep.subr.mxu0 0.0
        %827 = vmatpush1.xpose.msra.mxu0 0.0
        %828 = vmatprep.subr.mxu0 0.0
        %829 = vmatpush1.xpose.msra.mxu0 0.0
        %830 = vmatprep.subr.mxu0 0.0
        %831 = vmatpush1.xpose.msra.mxu0 0.0
        %832 = vmatprep.subr.mxu0 0.0
        %833 = vmatpush1.xpose.msra.mxu0 0.0
        %834 = vmatprep.subr.mxu0 0.0
        %835 = vmatpush1.xpose.msra.mxu0 0.0
        %836 = vmatprep.subr.mxu0 0.0
        %837 = vmatpush1.xpose.msra.mxu0 0.0
        %838 = vmatprep.subr.mxu0 0.0
        %839 = vmatpush1.xpose.msra.mxu0 0.0
        %840 = vmatprep.subr.mxu0 0.0
        %841 = vmatpush1.xpose.msra.mxu0 0.0
        %842 = vmatprep.subr.mxu0 0.0
        %843 = vmatpush1.xpose.msra.mxu0 0.0
        %844 = vmatprep.subr.mxu0 0.0
        %845 = vmatpush1.xpose.msra.mxu0 0.0
        %846 = vmatprep.subr.mxu0 0.0
        %847 = vmatpush1.xpose.msra.mxu0 0.0
        %848 = vmatprep.subr.mxu0 0.0
        %849 = vmatpush1.xpose.msra.mxu0 0.0
        %850 = vmatprep.subr.mxu0 0.0
        %851 = vmatpush1.xpose.msra.mxu0 0.0
        %852 = vmatprep.subr.mxu0 0.0
        %853 = vmatpush1.xpose.msra.mxu0 0.0
        %854 = vmatprep.subr.mxu0 0.0
        %855 = vmatpush1.xpose.msra.mxu0 0.0
        %856 = vmatprep.subr.mxu0 0.0
        %857 = vmatpush1.xpose.msra.mxu0 0.0
        %858 = vmatprep.subr.mxu0 0.0
        %859 = vmatpush1.xpose.msra.mxu0 0.0
        %860 = vmatprep.subr.mxu0 0.0
        %861 = vmatpush1.xpose.msra.mxu0 0.0
        %862 = vmatprep.subr.mxu0 0.0
        %863 = vmatpush1.xpose.msra.mxu0 0.0
        %864 = vmatprep.subr.mxu0 0.0
        %865 = vmatpush1.xpose.msra.mxu0 0.0
        %866 = vmatprep.subr.mxu0 0.0
        %867 = vmatpush1.xpose.msra.mxu0 0.0
        %868 = vmatprep.subr.mxu0 0.0
        %869 = vmatpush1.xpose.msra.mxu0 0.0
        %870 = vmatprep.subr.mxu0 0.0
        %871 = vmatpush1.xpose.msra.mxu0 0.0
        %872 = vmatprep.subr.mxu0 0.0
        %873 = vmatpush1.xpose.msra.mxu0 0.0
        %874 = vmatprep.subr.mxu0 0.0
        %875 = vmatpush1.xpose.msra.mxu0 0.0
        %876 = vmatprep.subr.mxu0 0.0
        %877 = vmatpush1.xpose.msra.mxu0 0.0
        %878 = vmatprep.subr.mxu0 0.0
        %879 = vmatpush1.xpose.msra.mxu0 0.0
        %880 = vmatprep.subr.mxu0 0.0
        %881 = vmatpush1.xpose.msra.mxu0 0.0
        %882 = vmatprep.subr.mxu0 0.0
        %883 = vmatpush1.xpose.msra.mxu0 0.0
        %884 = vmatprep.subr.mxu0 0.0
        %885 = vmatpush1.xpose.msra.mxu0 0.0
        %886 = vmatprep.mubr.f32.mxu0 0.0
        %887 = vmatmul.mubr.f32.gmra.mrb[0].mxu0 %v817
        %v888 = vpop.f32.mrb[0].mxu0
        %v889 = vadd.f32 0.0, %v888
        %v890 = vpop.f32.mrb[0].mxu0
        %891 = vdwg.mxu0
        %v893 = vsel %vm453, %v631, 0
        %v896 = vsel %vm453, %v724, 0
        %898 = vmatprep.subr.mxu0 0.0
        %899 = vmatpush1.xpose.msra.mxu0 %v896
        %900 = vmatprep.subr.mxu0 0.0
        %901 = vmatpush1.xpose.msra.mxu0 0.0
        %902 = vmatprep.subr.mxu0 0.0
        %903 = vmatpush1.xpose.msra.mxu0 0.0
        %904 = vmatprep.subr.mxu0 0.0
        %905 = vmatpush1.xpose.msra.mxu0 0.0
        %906 = vmatprep.subr.mxu0 0.0
        %907 = vmatpush1.xpose.msra.mxu0 0.0
        %908 = vmatprep.subr.mxu0 0.0
        %909 = vmatpush1.xpose.msra.mxu0 0.0
        %910 = vmatprep.subr.mxu0 0.0
        %911 = vmatpush1.xpose.msra.mxu0 0.0
        %912 = vmatprep.subr.mxu0 0.0
        %913 = vmatpush1.xpose.msra.mxu0 0.0
        %914 = vmatprep.subr.mxu0 0.0
        %915 = vmatpush1.xpose.msra.mxu0 0.0
        %916 = vmatprep.subr.mxu0 0.0
        %917 = vmatpush1.xpose.msra.mxu0 0.0
        %918 = vmatprep.subr.mxu0 0.0
        %919 = vmatpush1.xpose.msra.mxu0 0.0
        %920 = vmatprep.subr.mxu0 0.0
        %921 = vmatpush1.xpose.msra.mxu0 0.0
        %922 = vmatprep.subr.mxu0 0.0
        %923 = vmatpush1.xpose.msra.mxu0 0.0
        %924 = vmatprep.subr.mxu0 0.0
        %925 = vmatpush1.xpose.msra.mxu0 0.0
        %926 = vmatprep.subr.mxu0 0.0
        %927 = vmatpush1.xpose.msra.mxu0 0.0
        %928 = vmatprep.subr.mxu0 0.0
        %929 = vmatpush1.xpose.msra.mxu0 0.0
        %930 = vmatprep.subr.mxu0 0.0
        %931 = vmatpush1.xpose.msra.mxu0 0.0
        %932 = vmatprep.subr.mxu0 0.0
        %933 = vmatpush1.xpose.msra.mxu0 0.0
        %934 = vmatprep.subr.mxu0 0.0
        %935 = vmatpush1.xpose.msra.mxu0 0.0
        %936 = vmatprep.subr.mxu0 0.0
        %937 = vmatpush1.xpose.msra.mxu0 0.0
        %938 = vmatprep.subr.mxu0 0.0
        %939 = vmatpush1.xpose.msra.mxu0 0.0
        %940 = vmatprep.subr.mxu0 0.0
        %941 = vmatpush1.xpose.msra.mxu0 0.0
        %942 = vmatprep.subr.mxu0 0.0
        %943 = vmatpush1.xpose.msra.mxu0 0.0
        %944 = vmatprep.subr.mxu0 0.0
        %945 = vmatpush1.xpose.msra.mxu0 0.0
        %946 = vmatprep.subr.mxu0 0.0
        %947 = vmatpush1.xpose.msra.mxu0 0.0
        %948 = vmatprep.subr.mxu0 0.0
        %949 = vmatpush1.xpose.msra.mxu0 0.0
        %950 = vmatprep.subr.mxu0 0.0
        %951 = vmatpush1.xpose.msra.mxu0 0.0
        %952 = vmatprep.subr.mxu0 0.0
        %953 = vmatpush1.xpose.msra.mxu0 0.0
        %954 = vmatprep.subr.mxu0 0.0
        %955 = vmatpush1.xpose.msra.mxu0 0.0
        %956 = vmatprep.subr.mxu0 0.0
        %957 = vmatpush1.xpose.msra.mxu0 0.0
        %958 = vmatprep.subr.mxu0 0.0
        %959 = vmatpush1.xpose.msra.mxu0 0.0
        %960 = vmatprep.subr.mxu0 0.0
        %961 = vmatpush1.xpose.msra.mxu0 0.0
        %962 = vmatprep.mubr.f32.mxu0 0.0
        %963 = vmatmul.mubr.f32.gmra.mrb[0].mxu0 %v893
        %v964 = vpop.f32.mrb[0].mxu0
        %v965 = vadd.f32 0.0, %v964
        %v966 = vpop.f32.mrb[0].mxu0
        %967 = vdwg.mxu0
        %v969 = vsel %vm453, %v636, 0
        %v972 = vsel %vm453, %v729, 0
        %974 = vmatprep.subr.mxu0 0.0
        %975 = vmatpush1.xpose.msra.mxu0 %v972
        %976 = vmatprep.subr.mxu0 0.0
        %977 = vmatpush1.xpose.msra.mxu0 0.0
        %978 = vmatprep.subr.mxu0 0.0
        %979 = vmatpush1.xpose.msra.mxu0 0.0
        %980 = vmatprep.subr.mxu0 0.0
        %981 = vmatpush1.xpose.msra.mxu0 0.0
        %982 = vmatprep.subr.mxu0 0.0
        %983 = vmatpush1.xpose.msra.mxu0 0.0
        %984 = vmatprep.subr.mxu0 0.0
        %985 = vmatpush1.xpose.msra.mxu0 0.0
        %986 = vmatprep.subr.mxu0 0.0
        %987 = vmatpush1.xpose.msra.mxu0 0.0
        %988 = vmatprep.subr.mxu0 0.0
        %989 = vmatpush1.xpose.msra.mxu0 0.0
        %990 = vmatprep.subr.mxu0 0.0
        %991 = vmatpush1.xpose.msra.mxu0 0.0
        %992 = vmatprep.subr.mxu0 0.0
        %993 = vmatpush1.xpose.msra.mxu0 0.0
        %994 = vmatprep.subr.mxu0 0.0
        %995 = vmatpush1.xpose.msra.mxu0 0.0
        %996 = vmatprep.subr.mxu0 0.0
        %997 = vmatpush1.xpose.msra.mxu0 0.0
        %998 = vmatprep.subr.mxu0 0.0
        %999 = vmatpush1.xpose.msra.mxu0 0.0
        %1000 = vmatprep.subr.mxu0 0.0
        %1001 = vmatpush1.xpose.msra.mxu0 0.0
        %1002 = vmatprep.subr.mxu0 0.0
        %1003 = vmatpush1.xpose.msra.mxu0 0.0
        %1004 = vmatprep.subr.mxu0 0.0
        %1005 = vmatpush1.xpose.msra.mxu0 0.0
        %1006 = vmatprep.subr.mxu0 0.0
        %1007 = vmatpush1.xpose.msra.mxu0 0.0
        %1008 = vmatprep.subr.mxu0 0.0
        %1009 = vmatpush1.xpose.msra.mxu0 0.0
        %1010 = vmatprep.subr.mxu0 0.0
        %1011 = vmatpush1.xpose.msra.mxu0 0.0
        %1012 = vmatprep.subr.mxu0 0.0
        %1013 = vmatpush1.xpose.msra.mxu0 0.0
        %1014 = vmatprep.subr.mxu0 0.0
        %1015 = vmatpush1.xpose.msra.mxu0 0.0
        %1016 = vmatprep.subr.mxu0 0.0
        %1017 = vmatpush1.xpose.msra.mxu0 0.0
        %1018 = vmatprep.subr.mxu0 0.0
        %1019 = vmatpush1.xpose.msra.mxu0 0.0
        %1020 = vmatprep.subr.mxu0 0.0
        %1021 = vmatpush1.xpose.msra.mxu0 0.0
        %1022 = vmatprep.subr.mxu0 0.0
        %1023 = vmatpush1.xpose.msra.mxu0 0.0
        %1024 = vmatprep.subr.mxu0 0.0
        %1025 = vmatpush1.xpose.msra.mxu0 0.0
        %1026 = vmatprep.subr.mxu0 0.0
        %1027 = vmatpush1.xpose.msra.mxu0 0.0
        %1028 = vmatprep.subr.mxu0 0.0
        %1029 = vmatpush1.xpose.msra.mxu0 0.0
        %1030 = vmatprep.subr.mxu0 0.0
        %1031 = vmatpush1.xpose.msra.mxu0 0.0
        %1032 = vmatprep.subr.mxu0 0.0
        %1033 = vmatpush1.xpose.msra.mxu0 0.0
        %1034 = vmatprep.subr.mxu0 0.0
        %1035 = vmatpush1.xpose.msra.mxu0 0.0
        %1036 = vmatprep.subr.mxu0 0.0
        %1037 = vmatpush1.xpose.msra.mxu0 0.0
        %1038 = vmatprep.mubr.f32.mxu0 0.0
        %1039 = vmatmul.mubr.f32.gmra.mrb[0].mxu0 %v969
        %v1040 = vpop.f32.mrb[0].mxu0
        %v1041 = vadd.f32 0.0, %v1040
        %v1042 = vpop.f32.mrb[0].mxu0
        %1043 = vdwg.mxu0
        %v1044 = vmul.f32 %v889, 0.17677669
        %v1045 = vmul.f32 %v965, 0.17677669
        %v1046 = vmul.f32 %v1041, 0.17677669
        %vm1047 = vcmask 64512
        %v1048 = vsel %vm1047, %v1044, -inf
        %1049 = vmax.xlane.f32.xlu0 %v1048
        %v1050 = vpop.xlane.xlu0 %1049
        %v1051 = vsel %vm1047, %v1045, -inf
        %1052 = vmax.xlane.f32.xlu0 %v1051
        %v1053 = vpop.xlane.xlu0 %1052
        %v1054 = vsel %vm1047, %v1046, -inf
        %1055 = vmax.xlane.f32.xlu0 %v1054
        %v1056 = vpop.xlane.xlu0 %1055
        %v1057 = vsub.f32 %v1044, %v1050
        %v1058 = vsub.f32 %v1045, %v1053
        %v1059 = vsub.f32 %v1046, %v1056
        %v1060 = vmul.f32 %v1057, 1.442695
        %v1061 = vpow.pop %v1060
        %v1062 = vmul.f32 %v1058, 1.442695
        %v1063 = vpow.pop %v1062
        %v1064 = vmul.f32 %v1059, 1.442695
        %v1065 = vpow.pop %v1064
        %v1066 = vsel %vm1047, %v1061, 0.0
        %1067 = vadd.xlane.f32.xlu0 %v1066
        %v1068 = vpop.xlane.xlu0 %1067
        %v1069 = vsel %vm1047, %v1063, 0.0
        %1070 = vadd.xlane.f32.xlu0 %v1069
        %v1071 = vpop.xlane.xlu0 %1070
        %v1072 = vsel %vm1047, %v1065, 0.0
        %1073 = vadd.xlane.f32.xlu0 %v1072
        %v1074 = vpop.xlane.xlu0 %1073
        %v1075 = vrcp.pop %v1068
        %v1076 = vrcp.pop %v1071
        %v1077 = vrcp.pop %v1074
        %v1078 = vmul.f32 %v1061, %v1075
        %v1079 = vmul.f32 %v1063, %v1076
        %v1080 = vmul.f32 %v1065, %v1077
        %v1081 = vsel %vm1047, %v1078, 0.0
        %v1082 = vrot.slane %v1081, 4
        %v1083 = vadd.f32 %v1081, %v1082
        %v1084 = vrot.slane %v1083, 2
        %v1085 = vadd.f32 %v1083, %v1084
        %v1086 = vrot.slane %v1085, 1
        %v1087 = vadd.f32 %v1085, %v1086
        %v1088 = vsel %vm1047, %v1079, 0.0
        %v1089 = vrot.slane %v1088, 4
        %v1090 = vadd.f32 %v1088, %v1089
        %v1091 = vrot.slane %v1090, 2
        %v1092 = vadd.f32 %v1090, %v1091
        %v1093 = vrot.slane %v1092, 1
        %v1094 = vadd.f32 %v1092, %v1093
        %v1095 = vsel %vm1047, %v1080, 0.0
        %v1096 = vrot.slane %v1095, 4
        %v1097 = vadd.f32 %v1095, %v1096
        %v1098 = vrot.slane %v1097, 2
        %v1099 = vadd.f32 %v1097, %v1098
        %v1100 = vrot.slane %v1099, 1
        %v1101 = vadd.f32 %v1099, %v1100
        %v1102 = vrcp.pop 8.0
        %v1103 = vmul.f32 %v1087, %v1102
        %v1104 = vmul.f32 %v1094, %v1102
        %v1105 = vmul.f32 %v1101, %v1102
        %v1107 = vsel %vm1047, %v1103, 0
        %1109 = vmatprep.subr.mxu0 0.0
        %1110 = vmatpush1.msra.mxu0 %v803
        %1111 = vmatprep.subr.mxu0 0.0
        %1112 = vmatpush1.msra.mxu0 0.0
        %1113 = vmatprep.subr.mxu0 0.0
        %1114 = vmatpush1.msra.mxu0 0.0
        %1115 = vmatprep.subr.mxu0 0.0
        %1116 = vmatpush1.msra.mxu0 0.0
        %1117 = vmatprep.subr.mxu0 0.0
        %1118 = vmatpush1.msra.mxu0 0.0
        %1119 = vmatprep.subr.mxu0 0.0
        %1120 = vmatpush1.msra.mxu0 0.0
        %1121 = vmatprep.subr.mxu0 0.0
        %1122 = vmatpush1.msra.mxu0 0.0
        %1123 = vmatprep.subr.mxu0 0.0
        %1124 = vmatpush1.msra.mxu0 0.0
        %1125 = vmatprep.subr.mxu0 0.0
        %1126 = vmatpush1.msra.mxu0 0.0
        %1127 = vmatprep.subr.mxu0 0.0
        %1128 = vmatpush1.msra.mxu0 0.0
        %1129 = vmatprep.subr.mxu0 0.0
        %1130 = vmatpush1.msra.mxu0 0.0
        %1131 = vmatprep.subr.mxu0 0.0
        %1132 = vmatpush1.msra.mxu0 0.0
        %1133 = vmatprep.subr.mxu0 0.0
        %1134 = vmatpush1.msra.mxu0 0.0
        %1135 = vmatprep.subr.mxu0 0.0
        %1136 = vmatpush1.msra.mxu0 0.0
        %1137 = vmatprep.subr.mxu0 0.0
        %1138 = vmatpush1.msra.mxu0 0.0
        %1139 = vmatprep.subr.mxu0 0.0
        %1140 = vmatpush1.msra.mxu0 0.0
        %1141 = vmatprep.subr.mxu0 0.0
        %1142 = vmatpush1.msra.mxu0 0.0
        %1143 = vmatprep.subr.mxu0 0.0
        %1144 = vmatpush1.msra.mxu0 0.0
        %1145 = vmatprep.subr.mxu0 0.0
        %1146 = vmatpush1.msra.mxu0 0.0
        %1147 = vmatprep.subr.mxu0 0.0
        %1148 = vmatpush1.msra.mxu0 0.0
        %1149 = vmatprep.subr.mxu0 0.0
        %1150 = vmatpush1.msra.mxu0 0.0
        %1151 = vmatprep.subr.mxu0 0.0
        %1152 = vmatpush1.msra.mxu0 0.0
        %1153 = vmatprep.subr.mxu0 0.0
        %1154 = vmatpush1.msra.mxu0 0.0
        %1155 = vmatprep.subr.mxu0 0.0
        %1156 = vmatpush1.msra.mxu0 0.0
        %1157 = vmatprep.subr.mxu0 0.0
        %1158 = vmatpush1.msra.mxu0 0.0
        %1159 = vmatprep.subr.mxu0 0.0
        %1160 = vmatpush1.msra.mxu0 0.0
        %1161 = vmatprep.subr.mxu0 0.0
        %1162 = vmatpush1.msra.mxu0 0.0
        %1163 = vmatprep.subr.mxu0 0.0
        %1164 = vmatpush1.msra.mxu0 0.0
        %1165 = vmatprep.subr.mxu0 0.0
        %1166 = vmatpush1.msra.mxu0 0.0
        %1167 = vmatprep.subr.mxu0 0.0
        %1168 = vmatpush1.msra.mxu0 0.0
        %1169 = vmatprep.subr.mxu0 0.0
        %1170 = vmatpush1.msra.mxu0 0.0
        %1171 = vmatprep.subr.mxu0 0.0
        %1172 = vmatpush1.msra.mxu0 0.0
        %1173 = vmatprep.mubr.f32.mxu0 0.0
        %1174 = vmatmul.mubr.f32.gmra.mrb[0].mxu0 %v1107
        %v1175 = vpop.f32.mrb[0].mxu0
        %v1176 = vadd.f32 0.0, %v1175
        %v1177 = vpop.f32.mrb[0].mxu0
        %1178 = vdwg.mxu0
        %v1180 = vsel %vm1047, %v1104, 0
        %1182 = vmatprep.subr.mxu0 0.0
        %1183 = vmatpush1.msra.mxu0 %v808
        %1184 = vmatprep.subr.mxu0 0.0
        %1185 = vmatpush1.msra.mxu0 0.0
        %1186 = vmatprep.subr.mxu0 0.0
        %1187 = vmatpush1.msra.mxu0 0.0
        %1188 = vmatprep.subr.mxu0 0.0
        %1189 = vmatpush1.msra.mxu0 0.0
        %1190 = vmatprep.subr.mxu0 0.0
        %1191 = vmatpush1.msra.mxu0 0.0
        %1192 = vmatprep.subr.mxu0 0.0
        %1193 = vmatpush1.msra.mxu0 0.0
        %1194 = vmatprep.subr.mxu0 0.0
        %1195 = vmatpush1.msra.mxu0 0.0
        %1196 = vmatprep.subr.mxu0 0.0
        %1197 = vmatpush1.msra.mxu0 0.0
        %1198 = vmatprep.subr.mxu0 0.0
        %1199 = vmatpush1.msra.mxu0 0.0
        %1200 = vmatprep.subr.mxu0 0.0
        %1201 = vmatpush1.msra.mxu0 0.0
        %1202 = vmatprep.subr.mxu0 0.0
        %1203 = vmatpush1.msra.mxu0 0.0
        %1204 = vmatprep.subr.mxu0 0.0
        %1205 = vmatpush1.msra.mxu0 0.0
        %1206 = vmatprep.subr.mxu0 0.0
        %1207 = vmatpush1.msra.mxu0 0.0
        %1208 = vmatprep.subr.mxu0 0.0
        %1209 = vmatpush1.msra.mxu0 0.0
        %1210 = vmatprep.subr.mxu0 0.0
        %1211 = vmatpush1.msra.mxu0 0.0
        %1212 = vmatprep.subr.mxu0 0.0
        %1213 = vmatpush1.msra.mxu0 0.0
        %1214 = vmatprep.subr.mxu0 0.0
        %1215 = vmatpush1.msra.mxu0 0.0
        %1216 = vmatprep.subr.mxu0 0.0
        %1217 = vmatpush1.msra.mxu0 0.0
        %1218 = vmatprep.subr.mxu0 0.0
        %1219 = vmatpush1.msra.mxu0 0.0
        %1220 = vmatprep.subr.mxu0 0.0
        %1221 = vmatpush1.msra.mxu0 0.0
        %1222 = vmatprep.subr.mxu0 0.0
        %1223 = vmatpush1.msra.mxu0 0.0
        %1224 = vmatprep.subr.mxu0 0.0
        %1225 = vmatpush1.msra.mxu0 0.0
        %1226 = vmatprep.subr.mxu0 0.0
        %1227 = vmatpush1.msra.mxu0 0.0
        %1228 = vmatprep.subr.mxu0 0.0
        %1229 = vmatpush1.msra.mxu0 0.0
        %1230 = vmatprep.subr.mxu0 0.0
        %1231 = vmatpush1.msra.mxu0 0.0
        %1232 = vmatprep.subr.mxu0 0.0
        %1233 = vmatpush1.msra.mxu0 0.0
        %1234 = vmatprep.subr.mxu0 0.0
        %1235 = vmatpush1.msra.mxu0 0.0
        %1236 = vmatprep.subr.mxu0 0.0
        %1237 = vmatpush1.msra.mxu0 0.0
        %1238 = vmatprep.subr.mxu0 0.0
        %1239 = vmatpush1.msra.mxu0 0.0
        %1240 = vmatprep.subr.mxu0 0.0
        %1241 = vmatpush1.msra.mxu0 0.0
        %1242 = vmatprep.subr.mxu0 0.0
        %1243 = vmatpush1.msra.mxu0 0.0
        %1244 = vmatprep.subr.mxu0 0.0
        %1245 = vmatpush1.msra.mxu0 0.0
        %1246 = vmatprep.mubr.f32.mxu0 0.0
        %1247 = vmatmul.mubr.f32.gmra.mrb[0].mxu0 %v1180
        %v1248 = vpop.f32.mrb[0].mxu0
        %v1249 = vadd.f32 0.0, %v1248
        %v1250 = vpop.f32.mrb[0].mxu0
        %1251 = vdwg.mxu0
        %v1253 = vsel %vm1047, %v1105, 0
        %1255 = vmatprep.subr.mxu0 0.0
        %1256 = vmatpush1.msra.mxu0 %v813
        %1257 = vmatprep.subr.mxu0 0.0
        %1258 = vmatpush1.msra.mxu0 0.0
        %1259 = vmatprep.subr.mxu0 0.0
        %1260 = vmatpush1.msra.mxu0 0.0
        %1261 = vmatprep.subr.mxu0 0.0
        %1262 = vmatpush1.msra.mxu0 0.0
        %1263 = vmatprep.subr.mxu0 0.0
        %1264 = vmatpush1.msra.mxu0 0.0
        %1265 = vmatprep.subr.mxu0 0.0
        %1266 = vmatpush1.msra.mxu0 0.0
        %1267 = vmatprep.subr.mxu0 0.0
        %1268 = vmatpush1.msra.mxu0 0.0
        %1269 = vmatprep.subr.mxu0 0.0
        %1270 = vmatpush1.msra.mxu0 0.0
        %1271 = vmatprep.subr.mxu0 0.0
        %1272 = vmatpush1.msra.mxu0 0.0
        %1273 = vmatprep.subr.mxu0 0.0
        %1274 = vmatpush1.msra.mxu0 0.0
        %1275 = vmatprep.subr.mxu0 0.0
        %1276 = vmatpush1.msra.mxu0 0.0
        %1277 = vmatprep.subr.mxu0 0.0
        %1278 = vmatpush1.msra.mxu0 0.0
        %1279 = vmatprep.subr.mxu0 0.0
        %1280 = vmatpush1.msra.mxu0 0.0
        %1281 = vmatprep.subr.mxu0 0.0
        %1282 = vmatpush1.msra.mxu0 0.0
        %1283 = vmatprep.subr.mxu0 0.0
        %1284 = vmatpush1.msra.mxu0 0.0
        %1285 = vmatprep.subr.mxu0 0.0
        %1286 = vmatpush1.msra.mxu0 0.0
        %1287 = vmatprep.subr.mxu0 0.0
        %1288 = vmatpush1.msra.mxu0 0.0
        %1289 = vmatprep.subr.mxu0 0.0
        %1290 = vmatpush1.msra.mxu0 0.0
        %1291 = vmatprep.subr.mxu0 0.0
        %1292 = vmatpush1.msra.mxu0 0.0
        %1293 = vmatprep.subr.mxu0 0.0
        %1294 = vmatpush1.msra.mxu0 0.0
        %1295 = vmatprep.subr.mxu0 0.0
        %1296 = vmatpush1.msra.mxu0 0.0
        %1297 = vmatprep.subr.mxu0 0.0
        %1298 = vmatpush1.msra.mxu0 0.0
        %1299 = vmatprep.subr.mxu0 0.0
        %1300 = vmatpush1.msra.mxu0 0.0
        %1301 = vmatprep.subr.mxu0 0.0
        %1302 = vmatpush1.msra.mxu0 0.0
        %1303 = vmatprep.subr.mxu0 0.0
        %1304 = vmatpush1.msra.mxu0 0.0
        %1305 = vmatprep.subr.mxu0 0.0
        %1306 = vmatpush1.msra.mxu0 0.0
        %1307 = vmatprep.subr.mxu0 0.0
        %1308 = vmatpush1.msra.mxu0 0.0
        %1309 = vmatprep.subr.mxu0 0.0
        %1310 = vmatpush1.msra.mxu0 0.0
        %1311 = vmatprep.subr.mxu0 0.0
        %1312 = vmatpush1.msra.mxu0 0.0
        %1313 = vmatprep.subr.mxu0 0.0
        %1314 = vmatpush1.msra.mxu0 0.0
        %1315 = vmatprep.subr.mxu0 0.0
        %1316 = vmatpush1.msra.mxu0 0.0
        %1317 = vmatprep.subr.mxu0 0.0
        %1318 = vmatpush1.msra.mxu0 0.0
        %1319 = vmatprep.mubr.f32.mxu0 0.0
        %1320 = vmatmul.mubr.f32.gmra.mrb[0].mxu0 %v1253
        %v1321 = vpop.f32.mrb[0].mxu0
        %v1322 = vadd.f32 0.0, %v1321
        %v1323 = vpop.f32.mrb[0].mxu0
        %1324 = vdwg.mxu0
        %v1325 = vld [vmem:[%s7] sm:$0xff]
        %v1326 = vld [vmem:[%s7 + $0x8] sm:$0xff]
        %v1327 = vld [vmem:[%s7 + $0x10] sm:$0xff]
        %v1328 = vld [vmem:[%s7 + $0x18] sm:$0xff]
        %v1329 = vld [vmem:[%s8] sm:$0x1]
        %v1331 = vlaneseq
        %v1332 = vshrl.u32 %v1331, 7
        %v1333 = vsub.s32 0, %v1332
        %v1334 = vrot.slane %v1329, %v1333
        %v1339 = vrot.slane %v1249, 7
        %vm1340 = vcmask 1041409
        %v1341 = vsel %vm1340, %v1339, %v1176
        %v1342 = vrot.slane %v1322, 6
        %vm1343 = vcmask 1042434
        %v1344 = vsel %vm1343, %v1342, %v1341
        %v1345 = vsel %vm453, %v1344, 0
        %1347 = vmatprep.subr.mxu0 0.0
        %1348 = vmatpush1.msra.mxu0 %v1325
        %1349 = vmatprep.subr.mxu0 0.0
        %1350 = vmatpush1.msra.mxu0 %v1326
        %1351 = vmatprep.subr.mxu0 0.0
        %1352 = vmatpush1.msra.mxu0 %v1327
        %1353 = vmatprep.subr.mxu0 0.0
        %1354 = vmatpush1.msra.mxu0 %v1328
        %1355 = vmatprep.subr.mxu0 0.0
        %1356 = vmatpush1.msra.mxu0 0.0
        %1357 = vmatprep.subr.mxu0 0.0
        %1358 = vmatpush1.msra.mxu0 0.0
        %1359 = vmatprep.subr.mxu0 0.0
        %1360 = vmatpush1.msra.mxu0 0.0
        %1361 = vmatprep.subr.mxu0 0.0
        %1362 = vmatpush1.msra.mxu0 0.0
        %1363 = vmatprep.subr.mxu0 0.0
        %1364 = vmatpush1.msra.mxu0 0.0
        %1365 = vmatprep.subr.mxu0 0.0
        %1366 = vmatpush1.msra.mxu0 0.0
        %1367 = vmatprep.subr.mxu0 0.0
        %1368 = vmatpush1.msra.mxu0 0.0
        %1369 = vmatprep.subr.mxu0 0.0
        %1370 = vmatpush1.msra.mxu0 0.0
        %1371 = vmatprep.subr.mxu0 0.0
        %1372 = vmatpush1.msra.mxu0 0.0
        %1373 = vmatprep.subr.mxu0 0.0
        %1374 = vmatpush1.msra.mxu0 0.0
        %1375 = vmatprep.subr.mxu0 0.0
        %1376 = vmatpush1.msra.mxu0 0.0
        %1377 = vmatprep.subr.mxu0 0.0
        %1378 = vmatpush1.msra.mxu0 0.0
        %1379 = vmatprep.subr.mxu0 0.0
        %1380 = vmatpush1.msra.mxu0 0.0
        %1381 = vmatprep.subr.mxu0 0.0
        %1382 = vmatpush1.msra.mxu0 0.0
        %1383 = vmatprep.subr.mxu0 0.0
        %1384 = vmatpush1.msra.mxu0 0.0
        %1385 = vmatprep.subr.mxu0 0.0
        %1386 = vmatpush1.msra.mxu0 0.0
        %1387 = vmatprep.subr.mxu0 0.0
        %1388 = vmatpush1.msra.mxu0 0.0
        %1389 = vmatprep.subr.mxu0 0.0
        %1390 = vmatpush1.msra.mxu0 0.0
        %1391 = vmatprep.subr.mxu0 0.0
        %1392 = vmatpush1.msra.mxu0 0.0
        %1393 = vmatprep.subr.mxu0 0.0
        %1394 = vmatpush1.msra.mxu0 0.0
        %1395 = vmatprep.subr.mxu0 0.0
        %1396 = vmatpush1.msra.mxu0 0.0
        %1397 = vmatprep.subr.mxu0 0.0
        %1398 = vmatpush1.msra.mxu0 0.0
        %1399 = vmatprep.subr.mxu0 0.0
        %1400 = vmatpush1.msra.mxu0 0.0
        %1401 = vmatprep.subr.mxu0 0.0
        %1402 = vmatpush1.msra.mxu0 0.0
        %1403 = vmatprep.subr.mxu0 0.0
        %1404 = vmatpush1.msra.mxu0 0.0
        %1405 = vmatprep.subr.mxu0 0.0
        %1406 = vmatpush1.msra.mxu0 0.0
        %1407 = vmatprep.subr.mxu0 0.0
        %1408 = vmatpush1.msra.mxu0 0.0
        %1409 = vmatprep.subr.mxu0 0.0
        %1410 = vmatpush1.msra.mxu0 0.0
        %1411 = vmatprep.mubr.f32.mxu0 0.0
        %1412 = vmatmul.mubr.f32.gmra.mrb[0].mxu0 %v1345
        %v1413 = vpop.f32.mrb[0].mxu0
        %v1414 = vadd.f32 %v1334, %v1413
        %v1415 = vpop.f32.mrb[0].mxu0
        %1416 = vdwg.mxu0
        %vm1417 = vcmask 10240
        %1418 = vst.msk [vmem:[%s435] sm:$0x7] %vm1417, %v1414
        %p1419 = scmp.lt.s32.totalorder %s27, 1
        %s1420 = scalar_select %p1419, %s27, 1
        %s1421 = smul.addr %s1420, 4
        %s1422 = scalar_lea.vmem %s9, %s1421
        // Predicated region
        $region77: #{tpu_custom_call.1} parent=55 // pred_check
          %p1423 = pneg %p244
        $region78: #{tpu_custom_call.1} parent=55 // pred_check_branch
          %1425 = sbr.rel (%p1423) target = $region80
        $region79: #{tpu_custom_call.1} parent=55 // pred_region
          _
        $region80: #{tpu_custom_call.1} parent=55 // pred_fallthru
          _
      $region56: #{tpu_custom_call.1} parent=5 // pred_fallthru
        _
      %p1426 = scmp.le.s32.totalorder 2, %s22
      // Predicated region
      $region81: #{tpu_custom_call.1} parent=5 // pred_check
        %p1427 = pneg %p1426
      $region82: #{tpu_custom_call.1} parent=5 // pred_check_branch
        %1429 = sbr.rel (%p1427) target = $region84
      $region83: #{tpu_custom_call.1} parent=5 // pred_region
        %s1430 = ssub.s32 %s22, 2
        // Predicated region
        $region85: #{tpu_custom_call.1} parent=83 // pred_check
          %p1431 = pneg %p250
        $region86: #{tpu_custom_call.1} parent=83 // pred_check_branch
          %1433 = sbr.rel (%p1431) target = $region88
        $region87: #{tpu_custom_call.1} parent=83 // pred_region
          %p1434 = scmp.lt.s32.totalorder %s28, 1
          %s1435 = scalar_select %p1434, %s28, 1
          %s1436 = smul.addr %s1435, 4
          %s1437 = scalar_lea.vmem %s9, %s1436
        $region88: #{tpu_custom_call.1} parent=83 // pred_fallthru
          _
      $region84: #{tpu_custom_call.1} parent=5 // pred_fallthru
        _
    $region6: #{tpu_custom_call.1} parent=1 // loop_footer
      %s26 = sadd.s32 1, %s22
    $region7: #{tpu_custom_call.1} parent=1 // loop_footer_branch
      %21 = sbr.rel target = $region3
    $region8: #{tpu_custom_call.1} parent=1 // loop_exit
      _
    %1438 = vsyncpa [#allocation3], 1
    %s1439 = scalar_lea.sflag [#allocation3], 1
    %1440 = vsyncpa %s1439, 1
    %1441 = vsyncpa [#allocation5], 1
    %s1442 = scalar_lea.sflag [#allocation5], 1
    %1443 = vsyncpa %s1442, 1
    %1444 = vsyncpa [#allocation8], 1

</llo_original>
